<compile_context>
chip_gen: v7x
topology: tpu7x:2x2x1
jax: 0.10.0
libtpu: 0.0.40
codegen_flags: <defaults>
</compile_context>

<pallas_src>
import functools

import jax
import jax.numpy as jnp
from jax import lax
from jax.experimental import pallas as pl
from jax.experimental.pallas import tpu as pltpu


def _conv3x3_widened(x_hwc, w_all, H, W, C_in, C_out):
    """3x3 'same' conv of one (H, W, C_in) bf16 image as a single wide matmul.

    w_all: (3*C_in, 3*C_out) with w_all[kw*C_in + ci, kh*C_out + co]
           = W_oihw[co, ci, kh, kw], i.e. the three kh taps are concatenated
           along the MXU N axis.
    Returns the f32 conv result, shape (H*W, C_out).
    """
    dt = x_hwc.dtype

    # kw-im2col with in-kernel zero padding of the columns: (H, W, 3*C_in)
    zc = jnp.zeros((H, 1, C_in), dt)
    x_l = jnp.concatenate([zc, x_hwc[:, :W - 1, :]], axis=1)   # kw = 0 tap
    x_r = jnp.concatenate([x_hwc[:, 1:, :], zc], axis=1)       # kw = 2 tap
    xcat = jnp.concatenate([x_l, x_hwc, x_r], axis=-1)

    # zero-pad the rows (leading dim only -> free reshape): (Hp*W, 3*C_in)
    zr = jnp.zeros((1, W, 3 * C_in), dt)
    xcol = jnp.concatenate([zr, xcat, zr], axis=0).reshape((H + 2) * W, 3 * C_in)

    # One wide MXU matmul: K = 3*C_in, N = 3*C_out, f32 accumulation.
    y = jnp.dot(xcol, w_all, preferred_element_type=jnp.float32)

    # Fold the kh taps: out[h*W+w] = sum_kh y[(h+kh)*W + w, kh*C_out:(kh+1)*C_out]
    HW = H * W
    return (y[0:HW, 0:C_out]
            + y[W:W + HW, C_out:2 * C_out]
            + y[2 * W:2 * W + HW, 2 * C_out:3 * C_out])


def basic_block_kernel(x_ref, w1_ref, s1_ref, b1_ref,
                       w2_ref, s2_ref, b2_ref, out_ref):
    """One block of `block_n` batch images per grid step.

    x_ref   : (block_n, H, W, Cin)   unpadded input, bf16
    w1_ref  : (3*Cin, 3*Cout)        conv1 weights, [kw*Cin+ci, kh*Cout+co], bf16
    s1_ref  : (1, Cout)  f32         folded BN1 scale
    b1_ref  : (1, Cout)  f32         folded BN1 bias
    w2_ref  : (3*Cout, 3*Cout)       conv2 weights, bf16
    s2_ref  : (1, Cout)  f32         folded BN2 scale
    b2_ref  : (1, Cout)  f32         folded BN2 bias
    out_ref : (block_n, H, W, Cout)  bf16 output
    """
    Bt, H, W, Cin = x_ref.shape
    Cout = out_ref.shape[-1]
    dt = x_ref.dtype  # bf16

    # Weights / folded-BN params are resident; load once (outside the b loop).
    w1 = w1_ref[...]
    w2 = w2_ref[...]
    s1 = s1_ref[...]
    b1 = b1_ref[...]
    s2 = s2_ref[...]
    b2 = b2_ref[...]

    for b in range(Bt):                       # static unroll over images
        x = x_ref[b]                          # (H, W, Cin) bf16

        # ---- conv1 (single wide matmul) -> bn1 (folded, f32) -> relu ----
        a1 = _conv3x3_widened(x, w1, H, W, Cin, Cout)
        h1 = jnp.maximum(a1 * s1 + b1, 0.0).astype(dt).reshape(H, W, Cout)

        # ---- conv2 (single wide matmul) ----
        a2 = _conv3x3_widened(h1, w2, H, W, Cout, Cout)

        # ---- residual from the lane-aligned unpadded input (no relayout) ----
        ident = x.reshape(H * W, Cin).astype(jnp.float32)

        # ---- bn2 (folded) + residual add + relu, f32; store bf16 ----
        o = jnp.maximum(a2 * s2 + b2 + ident, 0.0)
        out_ref[b] = o.reshape(H, W, Cout).astype(out_ref.dtype)


@functools.partial(jax.jit, static_argnames=("block_n",))
def basic_block_forward(x_nchw, w1_oihw, g1, be1, m1, v1,
                        w2_oihw, g2, be2, m2, v2, eps=1e-5, block_n=1):
    """NCHW in / NCHW out, matching the PyTorch module (eval-mode BN)."""
    N, Cin, H, W = x_nchw.shape
    Cout = w1_oihw.shape[0]
    # stride=1 / no-downsample BasicBlock: identity path requires Cin == Cout.
    assert Cin == Cout, "downsample / stride!=1 BasicBlock not supported"
    assert w1_oihw.shape == (Cout, Cin, 3, 3)
    assert w2_oihw.shape == (Cout, Cout, 3, 3)
    assert N % block_n == 0

    # NCHW -> NHWC with the bf16 cast fused into the same pass; no wrapper pad.
    x = jnp.transpose(x_nchw, (0, 2, 3, 1)).astype(jnp.bfloat16)

    # OIHW -> (kw*Cin + ci, kh*Cout + co): all three kh taps concatenated along
    # the MXU N axis so each conv is one (Hp*W, 3C) @ (3C, 3Cout) matmul.
    w1 = jnp.transpose(w1_oihw, (3, 1, 2, 0)).reshape(3 * Cin, 3 * Cout)
    w2 = jnp.transpose(w2_oihw, (3, 1, 2, 0)).reshape(3 * Cout, 3 * Cout)
    w1 = w1.astype(jnp.bfloat16)
    w2 = w2.astype(jnp.bfloat16)

    # Fold eval-mode BatchNorm into per-channel scale/bias (kept in f32).
    inv1 = g1 / jnp.sqrt(v1 + eps)
    inv2 = g2 / jnp.sqrt(v2 + eps)
    s1 = inv1.reshape(1, Cout).astype(jnp.float32)
    b1 = (be1 - m1 * inv1).reshape(1, Cout).astype(jnp.float32)
    s2 = inv2.reshape(1, Cout).astype(jnp.float32)
    b2 = (be2 - m2 * inv2).reshape(1, Cout).astype(jnp.float32)

    # 2 convs, 2 flops/MAC, (H+2) rows per conv due to the widened formulation.
    flops = 2 * (2 * N * (H + 2) * W * (3 * Cin) * (3 * Cout))
    bytes_accessed = (N * H * W * Cin * 2            # bf16 unpadded input
                      + N * H * W * Cout * 2         # bf16 output
                      + (w1.size + w2.size) * 2      # bf16 weights
                      + 4 * Cout * 4)                # f32 scales/biases

    out_nhwc = pl.pallas_call(
        basic_block_kernel,
        out_shape=jax.ShapeDtypeStruct((N, H, W, Cout), jnp.bfloat16),
        grid=(N // block_n,),
        in_specs=[
            pl.BlockSpec((block_n, H, W, Cin), lambda n: (n, 0, 0, 0)),
            pl.BlockSpec((3 * Cin, 3 * Cout), lambda n: (0, 0)),
            pl.BlockSpec((1, Cout), lambda n: (0, 0)),
            pl.BlockSpec((1, Cout), lambda n: (0, 0)),
            pl.BlockSpec((3 * Cout, 3 * Cout), lambda n: (0, 0)),
            pl.BlockSpec((1, Cout), lambda n: (0, 0)),
            pl.BlockSpec((1, Cout), lambda n: (0, 0)),
        ],
        out_specs=pl.BlockSpec((block_n, H, W, Cout), lambda n: (n, 0, 0, 0)),
        compiler_params=pltpu.CompilerParams(
            dimension_semantics=("parallel",),
            vmem_limit_bytes=48 * 1024 * 1024,       # <= v7x 64 MiB VMEM budget
        ),
        cost_estimate=pl.CostEstimate(flops=flops, transcendentals=0,
                                      bytes_accessed=bytes_accessed),
    )(x, w1, s1, b1, w2, s2, b2)

    # Layout plumbing for the NCHW/f32 test harness only; an NHWC bf16 network
    # would consume out_nhwc directly with no post-op.
    return jnp.transpose(out_nhwc, (0, 3, 1, 2)).astype(jnp.float32)


def _reference_forward(x, w1, g1, be1, m1, v1, w2, g2, be2, m2, v2, eps=1e-5):
    """Pure-JAX (XLA, f32) reference mirroring the PyTorch forward, NCHW/OIHW."""
    dn = lax.conv_dimension_numbers(x.shape, w1.shape, ("NCHW", "OIHW", "NCHW"))

    def bn(y, g, b, m, v):
        g = g.reshape(1, -1, 1, 1); b = b.reshape(1, -1, 1, 1)
        m = m.reshape(1, -1, 1, 1); v = v.reshape(1, -1, 1, 1)
        return (y - m) / jnp.sqrt(v + eps) * g + b

    out = lax.conv_general_dilated(x, w1, (1, 1), ((1, 1), (1, 1)),
                                   dimension_numbers=dn)
    out = jnp.maximum(bn(out, g1, be1, m1, v1), 0.0)
    out = lax.conv_general_dilated(out, w2, (1, 1), ((1, 1), (1, 1)),
                                   dimension_numbers=dn)
    out = bn(out, g2, be2, m2, v2) + x
    return jnp.maximum(out, 0.0)


if __name__ == "__main__":
    # Small, deterministic problem: BasicBlock(in_planes=4, planes=4, stride=1)
    N, C, H, W = 2, 4, 16, 16
    key = jax.random.PRNGKey(0)
    kx, kw1, kw2 = jax.random.split(key, 3)

    x = jax.random.normal(kx, (N, C, H, W), dtype=jnp.float32)        # NCHW

    fan_in = C * 3 * 3
    w1 = jax.random.normal(kw1, (C, C, 3, 3), jnp.float32) * (2.0 / fan_in) ** 0.5
    w2 = jax.random.normal(kw2, (C, C, 3, 3), jnp.float32) * (2.0 / fan_in) ** 0.5

    # Deterministic, non-trivial BatchNorm params (eval-mode running stats).
    ar = jnp.arange(C, dtype=jnp.float32)
    g1, be1 = 1.0 + 0.10 * ar, 0.05 * ar
    m1, v1 = 0.01 * ar, 1.0 + 0.02 * ar
    g2, be2 = 1.0 - 0.05 * ar, -0.03 * ar
    m2, v2 = -0.02 * ar, 1.0 + 0.05 * ar

    out = basic_block_forward(x, w1, g1, be1, m1, v1, w2, g2, be2, m2, v2)
    out = jax.block_until_ready(out)

    ref = _reference_forward(x, w1, g1, be1, m1, v1, w2, g2, be2, m2, v2)
    assert out.shape == (N, C, H, W)
    # bf16 activations / weights / output vs a pure-f32 XLA reference.
    assert jnp.allclose(out, ref, atol=5e-2, rtol=5e-2), "mismatch vs XLA reference"

    print("KERNEL_OK")
</pallas_src>

<mosaic_0001>
module attributes {stable_mosaic.version = 11 : i64} {
  func.func @basic_block_kernel(%arg0: i32, %arg1: memref<1x16x16x4xbf16, #tpu.memory_space<vmem>>, %arg2: memref<12x12xbf16, #tpu.memory_space<vmem>>, %arg3: memref<1x4xf32, #tpu.memory_space<vmem>>, %arg4: memref<1x4xf32, #tpu.memory_space<vmem>>, %arg5: memref<12x12xbf16, #tpu.memory_space<vmem>>, %arg6: memref<1x4xf32, #tpu.memory_space<vmem>>, %arg7: memref<1x4xf32, #tpu.memory_space<vmem>>, %arg8: memref<1x16x16x4xbf16, #tpu.memory_space<vmem>>) attributes {dimension_semantics = [#tpu.dimension_semantics<parallel>], iteration_bounds = array<i64: 2>, scalar_prefetch = 0 : i64, scratch_operands = 0 : i64, tpu.core_type = #tpu.core_type<tc>, window_params = [{transform_indices = @transform_0, window_bounds = array<i64: 1, 16, 16, 4>}, {pipeline_mode = #tpu.pipeline_mode<synchronous>, transform_indices = @transform_1, window_bounds = array<i64: 12, 12>}, {pipeline_mode = #tpu.pipeline_mode<synchronous>, transform_indices = @transform_2, window_bounds = array<i64: 1, 4>}, {pipeline_mode = #tpu.pipeline_mode<synchronous>, transform_indices = @transform_3, window_bounds = array<i64: 1, 4>}, {pipeline_mode = #tpu.pipeline_mode<synchronous>, transform_indices = @transform_4, window_bounds = array<i64: 12, 12>}, {pipeline_mode = #tpu.pipeline_mode<synchronous>, transform_indices = @transform_5, window_bounds = array<i64: 1, 4>}, {pipeline_mode = #tpu.pipeline_mode<synchronous>, transform_indices = @transform_6, window_bounds = array<i64: 1, 4>}, {transform_indices = @transform_7, window_bounds = array<i64: 1, 16, 16, 4>}]} {
    %c0 = arith.constant 0 : index
    %c0_0 = arith.constant 0 : index
    %0 = vector.load %arg2[%c0, %c0_0] : memref<12x12xbf16, #tpu.memory_space<vmem>>, vector<12x12xbf16>
    %c0_1 = arith.constant 0 : index
    %c0_2 = arith.constant 0 : index
    %1 = vector.load %arg5[%c0_1, %c0_2] : memref<12x12xbf16, #tpu.memory_space<vmem>>, vector<12x12xbf16>
    %c0_3 = arith.constant 0 : index
    %c0_4 = arith.constant 0 : index
    %2 = vector.load %arg3[%c0_3, %c0_4] : memref<1x4xf32, #tpu.memory_space<vmem>>, vector<1x4xf32>
    %c0_5 = arith.constant 0 : index
    %c0_6 = arith.constant 0 : index
    %3 = vector.load %arg4[%c0_5, %c0_6] : memref<1x4xf32, #tpu.memory_space<vmem>>, vector<1x4xf32>
    %c0_7 = arith.constant 0 : index
    %c0_8 = arith.constant 0 : index
    %4 = vector.load %arg6[%c0_7, %c0_8] : memref<1x4xf32, #tpu.memory_space<vmem>>, vector<1x4xf32>
    %c0_9 = arith.constant 0 : index
    %c0_10 = arith.constant 0 : index
    %5 = vector.load %arg7[%c0_9, %c0_10] : memref<1x4xf32, #tpu.memory_space<vmem>>, vector<1x4xf32>
    %c0_11 = arith.constant 0 : index
    %c0_12 = arith.constant 0 : index
    %c0_13 = arith.constant 0 : index
    %c0_14 = arith.constant 0 : index
    %6 = vector.load %arg1[%c0_11, %c0_12, %c0_13, %c0_14] : memref<1x16x16x4xbf16, #tpu.memory_space<vmem>>, vector<1x16x16x4xbf16>
    %7 = vector.shape_cast %6 : vector<1x16x16x4xbf16> to vector<16x16x4xbf16>
    %cst = arith.constant 0.000000e+00 : bf16
    %8 = vector.broadcast %cst : bf16 to vector<16x1x4xbf16>
    %9 = vector.extract_strided_slice %7 {offsets = [0, 0, 0], sizes = [16, 15, 4], strides = [1, 1, 1]} : vector<16x16x4xbf16> to vector<16x15x4xbf16>
    %10 = tpu.concatenate %8, %9 in 1 : vector<16x1x4xbf16>, vector<16x15x4xbf16> -> vector<16x16x4xbf16>
    %11 = vector.extract_strided_slice %7 {offsets = [0, 1, 0], sizes = [16, 15, 4], strides = [1, 1, 1]} : vector<16x16x4xbf16> to vector<16x15x4xbf16>
    %12 = tpu.concatenate %11, %8 in 1 : vector<16x15x4xbf16>, vector<16x1x4xbf16> -> vector<16x16x4xbf16>
    %13 = tpu.concatenate %10, %7, %12 in 2 : vector<16x16x4xbf16>, vector<16x16x4xbf16>, vector<16x16x4xbf16> -> vector<16x16x12xbf16>
    %cst_15 = arith.constant 0.000000e+00 : bf16
    %14 = vector.broadcast %cst_15 : bf16 to vector<1x16x12xbf16>
    %15 = tpu.concatenate %14, %13, %14 in 0 : vector<1x16x12xbf16>, vector<16x16x12xbf16>, vector<1x16x12xbf16> -> vector<18x16x12xbf16>
    %16 = vector.shape_cast %15 : vector<18x16x12xbf16> to vector<288x12xbf16>
    %cst_16 = arith.constant dense<0.000000e+00> : vector<288x12xf32>
    %17 = tpu.matmul %16, %0, %cst_16 {dimension_numbers = #tpu.dot_dimension_numbers<[1], [0], [0], [1], [0, 0, 1, 1], [], []>} : vector<288x12xbf16>, vector<12x12xbf16>, vector<288x12xf32> -> vector<288x12xf32>
    %18 = vector.extract_strided_slice %17 {offsets = [0, 0], sizes = [256, 4], strides = [1, 1]} : vector<288x12xf32> to vector<256x4xf32>
    %19 = vector.extract_strided_slice %17 {offsets = [16, 4], sizes = [256, 4], strides = [1, 1]} : vector<288x12xf32> to vector<256x4xf32>
    %20 = arith.addf %18, %19 : vector<256x4xf32>
    %21 = vector.extract_strided_slice %17 {offsets = [32, 8], sizes = [256, 4], strides = [1, 1]} : vector<288x12xf32> to vector<256x4xf32>
    %22 = arith.addf %20, %21 : vector<256x4xf32>
    %23 = vector.broadcast %2 : vector<1x4xf32> to vector<256x4xf32>
    %24 = arith.mulf %22, %23 : vector<256x4xf32>
    %25 = vector.broadcast %3 : vector<1x4xf32> to vector<256x4xf32>
    %26 = arith.addf %24, %25 : vector<256x4xf32>
    %cst_17 = arith.constant 0.000000e+00 : f32
    %27 = vector.broadcast %cst_17 : f32 to vector<256x4xf32>
    %28 = arith.maximumf %26, %27 : vector<256x4xf32>
    %29 = arith.truncf %28 : vector<256x4xf32> to vector<256x4xbf16>
    %30 = vector.shape_cast %29 : vector<256x4xbf16> to vector<16x16x4xbf16>
    %cst_18 = arith.constant 0.000000e+00 : bf16
    %31 = vector.broadcast %cst_18 : bf16 to vector<16x1x4xbf16>
    %32 = vector.extract_strided_slice %30 {offsets = [0, 0, 0], sizes = [16, 15, 4], strides = [1, 1, 1]} : vector<16x16x4xbf16> to vector<16x15x4xbf16>
    %33 = tpu.concatenate %31, %32 in 1 : vector<16x1x4xbf16>, vector<16x15x4xbf16> -> vector<16x16x4xbf16>
    %34 = vector.extract_strided_slice %30 {offsets = [0, 1, 0], sizes = [16, 15, 4], strides = [1, 1, 1]} : vector<16x16x4xbf16> to vector<16x15x4xbf16>
    %35 = tpu.concatenate %34, %31 in 1 : vector<16x15x4xbf16>, vector<16x1x4xbf16> -> vector<16x16x4xbf16>
    %36 = tpu.concatenate %33, %30, %35 in 2 : vector<16x16x4xbf16>, vector<16x16x4xbf16>, vector<16x16x4xbf16> -> vector<16x16x12xbf16>
    %cst_19 = arith.constant 0.000000e+00 : bf16
    %37 = vector.broadcast %cst_19 : bf16 to vector<1x16x12xbf16>
    %38 = tpu.concatenate %37, %36, %37 in 0 : vector<1x16x12xbf16>, vector<16x16x12xbf16>, vector<1x16x12xbf16> -> vector<18x16x12xbf16>
    %39 = vector.shape_cast %38 : vector<18x16x12xbf16> to vector<288x12xbf16>
    %cst_20 = arith.constant dense<0.000000e+00> : vector<288x12xf32>
    %40 = tpu.matmul %39, %1, %cst_20 {dimension_numbers = #tpu.dot_dimension_numbers<[1], [0], [0], [1], [0, 0, 1, 1], [], []>} : vector<288x12xbf16>, vector<12x12xbf16>, vector<288x12xf32> -> vector<288x12xf32>
    %41 = vector.extract_strided_slice %40 {offsets = [0, 0], sizes = [256, 4], strides = [1, 1]} : vector<288x12xf32> to vector<256x4xf32>
    %42 = vector.extract_strided_slice %40 {offsets = [16, 4], sizes = [256, 4], strides = [1, 1]} : vector<288x12xf32> to vector<256x4xf32>
    %43 = arith.addf %41, %42 : vector<256x4xf32>
    %44 = vector.extract_strided_slice %40 {offsets = [32, 8], sizes = [256, 4], strides = [1, 1]} : vector<288x12xf32> to vector<256x4xf32>
    %45 = arith.addf %43, %44 : vector<256x4xf32>
    %46 = vector.shape_cast %7 : vector<16x16x4xbf16> to vector<256x4xbf16>
    %47 = arith.extf %46 : vector<256x4xbf16> to vector<256x4xf32>
    %48 = vector.broadcast %4 : vector<1x4xf32> to vector<256x4xf32>
    %49 = arith.mulf %45, %48 : vector<256x4xf32>
    %50 = vector.broadcast %5 : vector<1x4xf32> to vector<256x4xf32>
    %51 = arith.addf %49, %50 : vector<256x4xf32>
    %52 = arith.addf %51, %47 : vector<256x4xf32>
    %cst_21 = arith.constant 0.000000e+00 : f32
    %53 = vector.broadcast %cst_21 : f32 to vector<256x4xf32>
    %54 = arith.maximumf %52, %53 : vector<256x4xf32>
    %55 = vector.shape_cast %54 : vector<256x4xf32> to vector<16x16x4xf32>
    %56 = arith.truncf %55 : vector<16x16x4xf32> to vector<16x16x4xbf16>
    %c0_22 = arith.constant 0 : index
    %c0_23 = arith.constant 0 : index
    %c0_24 = arith.constant 0 : index
    %c0_25 = arith.constant 0 : index
    %57 = vector.load %arg8[%c0_22, %c0_23, %c0_24, %c0_25] : memref<1x16x16x4xbf16, #tpu.memory_space<vmem>>, vector<1x16x16x4xbf16>
    %58 = vector.shape_cast %57 : vector<1x16x16x4xbf16> to vector<16x16x4xbf16>
    %59 = vector.shape_cast %56 : vector<16x16x4xbf16> to vector<1x16x16x4xbf16>
    tpu.vector_store %arg8[%c0_22, %c0_23, %c0_24, %c0_25], %59 {strides = array<i32>} : memref<1x16x16x4xbf16, #tpu.memory_space<vmem>>, vector<1x16x16x4xbf16>,
    return
  }
  func.func @transform_0(%arg0: i32) -> (i32, i32, i32, i32) {
    %c0_i32 = arith.constant 0 : i32
    %c0_i32_0 = arith.constant 0 : i32
    %c0_i32_1 = arith.constant 0 : i32
    %c0_i32_2 = arith.constant 0 : i32
    return %arg0, %c0_i32, %c0_i32_0, %c0_i32_1 : i32, i32, i32, i32
  }
  func.func @transform_1(%arg0: i32) -> (i32, i32) {
    %c0_i32 = arith.constant 0 : i32
    %c0_i32_0 = arith.constant 0 : i32
    %c0_i32_1 = arith.constant 0 : i32
    return %c0_i32, %c0_i32_0 : i32, i32
  }
  func.func @transform_2(%arg0: i32) -> (i32, i32) {
    %c0_i32 = arith.constant 0 : i32
    %c0_i32_0 = arith.constant 0 : i32
    %c0_i32_1 = arith.constant 0 : i32
    return %c0_i32, %c0_i32_0 : i32, i32
  }
  func.func @transform_3(%arg0: i32) -> (i32, i32) {
    %c0_i32 = arith.constant 0 : i32
    %c0_i32_0 = arith.constant 0 : i32
    %c0_i32_1 = arith.constant 0 : i32
    return %c0_i32, %c0_i32_0 : i32, i32
  }
  func.func @transform_4(%arg0: i32) -> (i32, i32) {
    %c0_i32 = arith.constant 0 : i32
    %c0_i32_0 = arith.constant 0 : i32
    %c0_i32_1 = arith.constant 0 : i32
    return %c0_i32, %c0_i32_0 : i32, i32
  }
  func.func @transform_5(%arg0: i32) -> (i32, i32) {
    %c0_i32 = arith.constant 0 : i32
    %c0_i32_0 = arith.constant 0 : i32
    %c0_i32_1 = arith.constant 0 : i32
    return %c0_i32, %c0_i32_0 : i32, i32
  }
  func.func @transform_6(%arg0: i32) -> (i32, i32) {
    %c0_i32 = arith.constant 0 : i32
    %c0_i32_0 = arith.constant 0 : i32
    %c0_i32_1 = arith.constant 0 : i32
    return %c0_i32, %c0_i32_0 : i32, i32
  }
  func.func @transform_7(%arg0: i32) -> (i32, i32, i32, i32) {
    %c0_i32 = arith.constant 0 : i32
    %c0_i32_0 = arith.constant 0 : i32
    %c0_i32_1 = arith.constant 0 : i32
    %c0_i32_2 = arith.constant 0 : i32
    return %arg0, %c0_i32, %c0_i32_0, %c0_i32_1 : i32, i32, i32, i32
  }
}

</mosaic_0001>

<llo_original>
// kernel: basic_block_forward.1
$region0: #{basic_block_forward.1}
  #allocation0 [shape = 'u32[]', space=smem, size = 0x4, offset = 0x4, fixed_abs, tag = 'smem constant byte address 0x4 - core index']
  #allocation1 [shape = 'u32[144,128]{1,0:T(1,128)}', space=vmem, size = 0x12000, scoped, tag = 'internal scratch']
  %s0 = inlined_call_operand.vmem [shape: bf16[2,16,16,4], index: 0, kind: input, shape index: {}]
  %s1 = inlined_call_operand.vmem [shape: bf16[12,12], index: 1, kind: input, shape index: {}]
  %s2 = inlined_call_operand.vmem [shape: f32[1,4], index: 2, kind: input, shape index: {}]
  %s3 = inlined_call_operand.vmem [shape: f32[1,4], index: 3, kind: input, shape index: {}]
  %s4 = inlined_call_operand.vmem [shape: bf16[12,12], index: 4, kind: input, shape index: {}]
  %s5 = inlined_call_operand.vmem [shape: f32[1,4], index: 5, kind: input, shape index: {}]
  %s6 = inlined_call_operand.vmem [shape: f32[1,4], index: 6, kind: input, shape index: {}]
  %s7 = inlined_call_operand.vmem [shape: bf16[2,16,16,4], index: 7, kind: output, shape index: {}]
  %s8 = sld [smem:[#allocation0]]
  $region61: #{basic_block_forward.1} parent=0
    _
  %s10 = ssub.s32 1, %s8
  %s11 = scalar_select 0, %s10, %s8
  loop: start=0, step=1, limit=4
  $region2: #{basic_block_forward.1} parent=0 // loop_pre_header
    _
  $region3: #{basic_block_forward.1} parent=0 // loop_header
    %s13 = sphi 0, %s17
    %p14 = scmp.ge.s32.totalorder %s13, 4
    %s23 = sphi 0, %s25
    %s26 = sphi 0, %s23
    %s27 = sphi 0, %s26
    %s43 = sphi 0, %s27
    %s47 = sphi 0, %s47
    %s49 = sphi 0, %s47
    %s50 = sphi 0, %s49
    %s64 = sphi 0, %s50
    %s68 = sphi 0, %s68
    %s70 = sphi 0, %s68
    %s71 = sphi 0, %s70
    %s85 = sphi 0, %s71
    %s89 = sphi 0, %s89
    %s91 = sphi 0, %s89
    %s92 = sphi 0, %s91
    %s106 = sphi 0, %s92
    %s110 = sphi 0, %s110
    %s112 = sphi 0, %s110
    %s113 = sphi 0, %s112
    %s127 = sphi 0, %s113
    %s131 = sphi 0, %s131
    %s133 = sphi 0, %s131
    %s134 = sphi 0, %s133
    %s148 = sphi 0, %s134
    %s152 = sphi 0, %s152
    %s154 = sphi 0, %s152
    %s155 = sphi 0, %s154
    %s169 = sphi 0, %s155
    %s175 = sphi 0, %s177
    %s178 = sphi 0, %s175
    %s179 = sphi 0, %s178
    %s195 = sphi 0, %s179
  $region4: #{basic_block_forward.1} parent=0 // loop_header_branch
    %16 = sbr.rel (%p14) target = $region8
  $region5: #{basic_block_forward.1} parent=0 // loop_body
    %s18 = ssub.s32 %s13, 1
    %s19 = ssub.s32 %s13, 2
    %s20 = sadd.s32 %s13, 1
    %s21 = ssub.s32 %s13, %s20
    %p22 = scmp.eq.s32.totalorder %s21, 0
    %s24 = sadd.s32 %s23, 1
    %s25 = scalar_select %p22, %s23, %s24
    %p28 = pneg %p22
    %p29 = scmp.eq.s32.totalorder %s13, 1
    %p30 = por %p28, %p29
    %p31 = scmp.ne.s32.totalorder %s23, %s26
    %p32 = scmp.eq.s32.totalorder %s13, 0
    %p33 = por %p31, %p32
    %p34 = scmp.ne.s32.totalorder %s23, %s26
    %p35 = scmp.eq.s32.totalorder %s18, 1
    %p36 = por %p34, %p35
    %p37 = scmp.ne.s32.totalorder %s26, %s27
    %p38 = scmp.eq.s32.totalorder %s18, 0
    %p39 = por %p37, %p38
    %p40 = scmp.ne.s32.totalorder %s26, %s27
    %p41 = scmp.eq.s32.totalorder %s19, 1
    %p42 = por %p40, %p41
    %p44 = scmp.ne.s32.totalorder %s27, %s43
    %p45 = scmp.eq.s32.totalorder %s19, 0
    %p46 = por %p44, %p45
    %s48 = sadd.s32 %s47, 1
    %p51 = scmp.eq.s32.totalorder %s13, 1
    %p52 = scmp.ne.s32.totalorder %s47, %s49
    %p53 = scmp.eq.s32.totalorder %s13, 0
    %p54 = por %p52, %p53
    %p55 = scmp.ne.s32.totalorder %s47, %s49
    %p56 = scmp.eq.s32.totalorder %s18, 1
    %p57 = por %p55, %p56
    %p58 = scmp.ne.s32.totalorder %s49, %s50
    %p59 = scmp.eq.s32.totalorder %s18, 0
    %p60 = por %p58, %p59
    %p61 = scmp.ne.s32.totalorder %s49, %s50
    %p62 = scmp.eq.s32.totalorder %s19, 1
    %p63 = por %p61, %p62
    %p65 = scmp.ne.s32.totalorder %s50, %s64
    %p66 = scmp.eq.s32.totalorder %s19, 0
    %p67 = por %p65, %p66
    %s69 = sadd.s32 %s68, 1
    %p72 = scmp.eq.s32.totalorder %s13, 1
    %p73 = scmp.ne.s32.totalorder %s68, %s70
    %p74 = scmp.eq.s32.totalorder %s13, 0
    %p75 = por %p73, %p74
    %p76 = scmp.ne.s32.totalorder %s68, %s70
    %p77 = scmp.eq.s32.totalorder %s18, 1
    %p78 = por %p76, %p77
    %p79 = scmp.ne.s32.totalorder %s70, %s71
    %p80 = scmp.eq.s32.totalorder %s18, 0
    %p81 = por %p79, %p80
    %p82 = scmp.ne.s32.totalorder %s70, %s71
    %p83 = scmp.eq.s32.totalorder %s19, 1
    %p84 = por %p82, %p83
    %p86 = scmp.ne.s32.totalorder %s71, %s85
    %p87 = scmp.eq.s32.totalorder %s19, 0
    %p88 = por %p86, %p87
    %s90 = sadd.s32 %s89, 1
    %p93 = scmp.eq.s32.totalorder %s13, 1
    %p94 = scmp.ne.s32.totalorder %s89, %s91
    %p95 = scmp.eq.s32.totalorder %s13, 0
    %p96 = por %p94, %p95
    %p97 = scmp.ne.s32.totalorder %s89, %s91
    %p98 = scmp.eq.s32.totalorder %s18, 1
    %p99 = por %p97, %p98
    %p100 = scmp.ne.s32.totalorder %s91, %s92
    %p101 = scmp.eq.s32.totalorder %s18, 0
    %p102 = por %p100, %p101
    %p103 = scmp.ne.s32.totalorder %s91, %s92
    %p104 = scmp.eq.s32.totalorder %s19, 1
    %p105 = por %p103, %p104
    %p107 = scmp.ne.s32.totalorder %s92, %s106
    %p108 = scmp.eq.s32.totalorder %s19, 0
    %p109 = por %p107, %p108
    %s111 = sadd.s32 %s110, 1
    %p114 = scmp.eq.s32.totalorder %s13, 1
    %p115 = scmp.ne.s32.totalorder %s110, %s112
    %p116 = scmp.eq.s32.totalorder %s13, 0
    %p117 = por %p115, %p116
    %p118 = scmp.ne.s32.totalorder %s110, %s112
    %p119 = scmp.eq.s32.totalorder %s18, 1
    %p120 = por %p118, %p119
    %p121 = scmp.ne.s32.totalorder %s112, %s113
    %p122 = scmp.eq.s32.totalorder %s18, 0
    %p123 = por %p121, %p122
    %p124 = scmp.ne.s32.totalorder %s112, %s113
    %p125 = scmp.eq.s32.totalorder %s19, 1
    %p126 = por %p124, %p125
    %p128 = scmp.ne.s32.totalorder %s113, %s127
    %p129 = scmp.eq.s32.totalorder %s19, 0
    %p130 = por %p128, %p129
    %s132 = sadd.s32 %s131, 1
    %p135 = scmp.eq.s32.totalorder %s13, 1
    %p136 = scmp.ne.s32.totalorder %s131, %s133
    %p137 = scmp.eq.s32.totalorder %s13, 0
    %p138 = por %p136, %p137
    %p139 = scmp.ne.s32.totalorder %s131, %s133
    %p140 = scmp.eq.s32.totalorder %s18, 1
    %p141 = por %p139, %p140
    %p142 = scmp.ne.s32.totalorder %s133, %s134
    %p143 = scmp.eq.s32.totalorder %s18, 0
    %p144 = por %p142, %p143
    %p145 = scmp.ne.s32.totalorder %s133, %s134
    %p146 = scmp.eq.s32.totalorder %s19, 1
    %p147 = por %p145, %p146
    %p149 = scmp.ne.s32.totalorder %s134, %s148
    %p150 = scmp.eq.s32.totalorder %s19, 0
    %p151 = por %p149, %p150
    %s153 = sadd.s32 %s152, 1
    %p156 = scmp.eq.s32.totalorder %s13, 1
    %p157 = scmp.ne.s32.totalorder %s152, %s154
    %p158 = scmp.eq.s32.totalorder %s13, 0
    %p159 = por %p157, %p158
    %p160 = scmp.ne.s32.totalorder %s152, %s154
    %p161 = scmp.eq.s32.totalorder %s18, 1
    %p162 = por %p160, %p161
    %p163 = scmp.ne.s32.totalorder %s154, %s155
    %p164 = scmp.eq.s32.totalorder %s18, 0
    %p165 = por %p163, %p164
    %p166 = scmp.ne.s32.totalorder %s154, %s155
    %p167 = scmp.eq.s32.totalorder %s19, 1
    %p168 = por %p166, %p167
    %p170 = scmp.ne.s32.totalorder %s155, %s169
    %p171 = scmp.eq.s32.totalorder %s19, 0
    %p172 = por %p170, %p171
    %s173 = ssub.s32 %s13, %s20
    %p174 = scmp.eq.s32.totalorder %s173, 0
    %s176 = sadd.s32 %s175, 1
    %s177 = scalar_select %p174, %s175, %s176
    %p180 = pneg %p174
    %p181 = scmp.eq.s32.totalorder %s13, 1
    %p182 = por %p180, %p181
    %p183 = scmp.ne.s32.totalorder %s175, %s178
    %p184 = scmp.eq.s32.totalorder %s13, 0
    %p185 = por %p183, %p184
    %p186 = scmp.ne.s32.totalorder %s175, %s178
    %p187 = scmp.eq.s32.totalorder %s18, 1
    %p188 = por %p186, %p187
    %p189 = scmp.ne.s32.totalorder %s178, %s179
    %p190 = scmp.eq.s32.totalorder %s18, 0
    %p191 = por %p189, %p190
    %p192 = scmp.ne.s32.totalorder %s178, %s179
    %p193 = scmp.eq.s32.totalorder %s19, 1
    %p194 = por %p192, %p193
    %p196 = scmp.ne.s32.totalorder %s179, %s195
    %p197 = scmp.eq.s32.totalorder %s19, 0
    %p198 = por %p196, %p197
    %p199 = scmp.le.s32.totalorder 1, %s13
    %p200 = scmp.lt.s32.totalorder %s13, 3
    %p201 = pnand %p199, %p200
    %p202 = pneg %p201
    // Predicated region
    $region9: #{basic_block_forward.1} parent=5 // pred_check
      _
    $region10: #{basic_block_forward.1} parent=5 // pred_check_branch
      %204 = sbr.rel (%p201) target = $region12
    $region11: #{basic_block_forward.1} parent=5 // pred_region
      %s205 = ssub.s32 %s13, 1
      // Predicated region
      $region13: #{basic_block_forward.1} parent=11 // pred_check
        %p206 = pneg %p60
      $region14: #{basic_block_forward.1} parent=11 // pred_check_branch
        %208 = sbr.rel (%p206) target = $region16
      $region15: #{basic_block_forward.1} parent=11 // pred_region
        _
      $region16: #{basic_block_forward.1} parent=11 // pred_fallthru
        _
      // Predicated region
      $region17: #{basic_block_forward.1} parent=11 // pred_check
        %p209 = pneg %p81
      $region18: #{basic_block_forward.1} parent=11 // pred_check_branch
        %211 = sbr.rel (%p209) target = $region20
      $region19: #{basic_block_forward.1} parent=11 // pred_region
        _
      $region20: #{basic_block_forward.1} parent=11 // pred_fallthru
        _
      // Predicated region
      $region21: #{basic_block_forward.1} parent=11 // pred_check
        %p212 = pneg %p102
      $region22: #{basic_block_forward.1} parent=11 // pred_check_branch
        %214 = sbr.rel (%p212) target = $region24
      $region23: #{basic_block_forward.1} parent=11 // pred_region
        _
      $region24: #{basic_block_forward.1} parent=11 // pred_fallthru
        _
      // Predicated region
      $region25: #{basic_block_forward.1} parent=11 // pred_check
        %p215 = pneg %p123
      $region26: #{basic_block_forward.1} parent=11 // pred_check_branch
        %217 = sbr.rel (%p215) target = $region28
      $region27: #{basic_block_forward.1} parent=11 // pred_region
        _
      $region28: #{basic_block_forward.1} parent=11 // pred_fallthru
        _
      // Predicated region
      $region29: #{basic_block_forward.1} parent=11 // pred_check
        %p218 = pneg %p144
      $region30: #{basic_block_forward.1} parent=11 // pred_check_branch
        %220 = sbr.rel (%p218) target = $region32
      $region31: #{basic_block_forward.1} parent=11 // pred_region
        _
      $region32: #{basic_block_forward.1} parent=11 // pred_fallthru
        _
      // Predicated region
      $region33: #{basic_block_forward.1} parent=11 // pred_check
        %p221 = pneg %p165
      $region34: #{basic_block_forward.1} parent=11 // pred_check_branch
        %223 = sbr.rel (%p221) target = $region36
      $region35: #{basic_block_forward.1} parent=11 // pred_region
        _
      $region36: #{basic_block_forward.1} parent=11 // pred_fallthru
        _
    $region12: #{basic_block_forward.1} parent=5 // pred_fallthru
      _
    %p224 = scmp.lt.s32.totalorder %s13, 2
    // Predicated region
    $region37: #{basic_block_forward.1} parent=5 // pred_check
      %p225 = pneg %p224
    $region38: #{basic_block_forward.1} parent=5 // pred_check_branch
      %227 = sbr.rel (%p225) target = $region40
    $region39: #{basic_block_forward.1} parent=5 // pred_region
      // Predicated region
      $region41: #{basic_block_forward.1} parent=39 // pred_check
        %p228 = pneg %p33
      $region42: #{basic_block_forward.1} parent=39 // pred_check_branch
        %230 = sbr.rel (%p228) target = $region44
      $region43: #{basic_block_forward.1} parent=39 // pred_region
        %p231 = scmp.lt.s32.totalorder %s13, 1
        %s232 = scalar_select %p231, %s13, 1
        %s233 = smul.addr %s232, 32
        %s234 = smul.addr %s233, 4
        %s235 = scalar_lea.vmem %s0, %s234
      $region44: #{basic_block_forward.1} parent=39 // pred_fallthru
        _
    $region40: #{basic_block_forward.1} parent=5 // pred_fallthru
      _
    %p236 = scmp.le.s32.totalorder 1, %s13
    %p237 = scmp.lt.s32.totalorder %s13, 3
    %p238 = pnand %p236, %p237
    %p239 = pneg %p238
    // Predicated region
    $region45: #{basic_block_forward.1} parent=5 // pred_check
      _
    $region46: #{basic_block_forward.1} parent=5 // pred_check_branch
      %241 = sbr.rel (%p238) target = $region48
    $region47: #{basic_block_forward.1} parent=5 // pred_region
      %s242 = ssub.s32 %s13, 1
      %p243 = scmp.lt.s32.totalorder %s18, 1
      %s244 = scalar_select %p243, %s18, 1
      %s245 = smul.addr %s244, 32
      %s246 = smul.addr %s245, 4
      %s247 = scalar_lea.vmem %s0, %s246
      %p248 = pneg %p39
      %p249 = pneg %p36
      %p250 = pneg %p60
      %p251 = pneg %p57
      %p252 = pneg %p81
      %p253 = pneg %p78
      %p254 = pneg %p102
      %p255 = pneg %p99
      %p256 = pneg %p123
      %p257 = pneg %p120
      %p258 = pneg %p144
      %p259 = pneg %p141
      %p260 = pneg %p165
      %p261 = pneg %p162
      %p262 = pneg %p191
      %p263 = pneg %p188
      %p264 = scmp.lt.s32.totalorder %s18, 1
      %s265 = scalar_select %p264, %s18, 1
      %s266 = smul.addr %s265, 32
      %s267 = smul.addr %s266, 4
      %s268 = scalar_lea.vmem %s7, %s267
      %p269 = scmp.lt.s32.totalorder %s18, 1
      %s270 = scalar_select %p269, %s18, 1
      %s271 = smul.addr %s270, 32
      %s272 = smul.addr %s271, 4
      %s273 = scalar_lea.vmem %s0, %s272
      %p274 = scmp.lt.s32.totalorder %s18, 1
      %s275 = scalar_select %p274, %s18, 1
      %s276 = smul.addr %s275, 32
      %s277 = smul.addr %s276, 4
      %s278 = scalar_lea.vmem %s7, %s277
      %v280 = vld [vmem:[%s1] sm:$0xf]
      %v281 = vld [vmem:[%s1 + $0x4] sm:$0x3]
      %v282 = vld [vmem:[%s4] sm:$0xf]
      %v283 = vld [vmem:[%s4 + $0x4] sm:$0x3]
      %v284 = vld [vmem:[%s2] sm:$0x1]
      %v285 = vld [vmem:[%s3] sm:$0x1]
      %v286 = vld [vmem:[%s5] sm:$0x1]
      %v287 = vld [vmem:[%s6] sm:$0x1]
      %v288 = vld [vmem:[%s273] sm:$0xf]
      %v289 = vld [vmem:[%s273 + $0x4] sm:$0xf]
      %v290 = vld [vmem:[%s273 + $0x8] sm:$0xf]
      %v291 = vld [vmem:[%s273 + $0xc] sm:$0xf]
      %v292 = vld [vmem:[%s273 + $0x10] sm:$0xf]
      %v293 = vld [vmem:[%s273 + $0x14] sm:$0xf]
      %v294 = vld [vmem:[%s273 + $0x18] sm:$0xf]
      %v295 = vld [vmem:[%s273 + $0x1c] sm:$0xf]
      %v296 = vld [vmem:[%s273 + $0x20] sm:$0xf]
      %v297 = vld [vmem:[%s273 + $0x24] sm:$0xf]
      %v298 = vld [vmem:[%s273 + $0x28] sm:$0xf]
      %v299 = vld [vmem:[%s273 + $0x2c] sm:$0xf]
      %v300 = vld [vmem:[%s273 + $0x30] sm:$0xf]
      %v301 = vld [vmem:[%s273 + $0x34] sm:$0xf]
      %v302 = vld [vmem:[%s273 + $0x38] sm:$0xf]
      %v303 = vld [vmem:[%s273 + $0x3c] sm:$0xf]
      %v304 = vld [vmem:[%s273 + $0x40] sm:$0xf]
      %v305 = vld [vmem:[%s273 + $0x44] sm:$0xf]
      %v306 = vld [vmem:[%s273 + $0x48] sm:$0xf]
      %v307 = vld [vmem:[%s273 + $0x4c] sm:$0xf]
      %v308 = vld [vmem:[%s273 + $0x50] sm:$0xf]
      %v309 = vld [vmem:[%s273 + $0x54] sm:$0xf]
      %v310 = vld [vmem:[%s273 + $0x58] sm:$0xf]
      %v311 = vld [vmem:[%s273 + $0x5c] sm:$0xf]
      %v312 = vld [vmem:[%s273 + $0x60] sm:$0xf]
      %v313 = vld [vmem:[%s273 + $0x64] sm:$0xf]
      %v314 = vld [vmem:[%s273 + $0x68] sm:$0xf]
      %v315 = vld [vmem:[%s273 + $0x6c] sm:$0xf]
      %v316 = vld [vmem:[%s273 + $0x70] sm:$0xf]
      %v317 = vld [vmem:[%s273 + $0x74] sm:$0xf]
      %v318 = vld [vmem:[%s273 + $0x78] sm:$0xf]
      %v319 = vld [vmem:[%s273 + $0x7c] sm:$0xf]
      %v352 = vunpack.c.l.b16 %v288
      %v353 = vunpack.c.l.b16 %v289
      %v354 = vunpack.c.l.b16 %v290
      %v355 = vunpack.c.l.b16 %v291
      %v356 = vunpack.c.l.b16 %v292
      %v357 = vunpack.c.l.b16 %v293
      %v358 = vunpack.c.l.b16 %v294
      %v359 = vunpack.c.l.b16 %v295
      %v360 = vunpack.c.l.b16 %v296
      %v361 = vunpack.c.l.b16 %v297
      %v362 = vunpack.c.l.b16 %v298
      %v363 = vunpack.c.l.b16 %v299
      %v364 = vunpack.c.l.b16 %v300
      %v365 = vunpack.c.l.b16 %v301
      %v366 = vunpack.c.l.b16 %v302
      %v367 = vunpack.c.l.b16 %v303
      %v368 = vunpack.c.l.b16 %v304
      %v369 = vunpack.c.l.b16 %v305
      %v370 = vunpack.c.l.b16 %v306
      %v371 = vunpack.c.l.b16 %v307
      %v372 = vunpack.c.l.b16 %v308
      %v373 = vunpack.c.l.b16 %v309
      %v374 = vunpack.c.l.b16 %v310
      %v375 = vunpack.c.l.b16 %v311
      %v376 = vunpack.c.l.b16 %v312
      %v377 = vunpack.c.l.b16 %v313
      %v378 = vunpack.c.l.b16 %v314
      %v379 = vunpack.c.l.b16 %v315
      %v380 = vunpack.c.l.b16 %v316
      %v381 = vunpack.c.l.b16 %v317
      %v382 = vunpack.c.l.b16 %v318
      %v383 = vunpack.c.l.b16 %v319
      %v384 = vpack.c.b16 %v353, %v352
      %v385 = vpack.c.b16 %v355, %v354
      %v386 = vpack.c.b16 %v357, %v356
      %v387 = vpack.c.b16 %v359, %v358
      %v388 = vpack.c.b16 %v361, %v360
      %v389 = vpack.c.b16 %v363, %v362
      %v390 = vpack.c.b16 %v365, %v364
      %v391 = vpack.c.b16 %v367, %v366
      %v392 = vpack.c.b16 %v369, %v368
      %v393 = vpack.c.b16 %v371, %v370
      %v394 = vpack.c.b16 %v373, %v372
      %v395 = vpack.c.b16 %v375, %v374
      %v396 = vpack.c.b16 %v377, %v376
      %v397 = vpack.c.b16 %v379, %v378
      %v398 = vpack.c.b16 %v381, %v380
      %v399 = vpack.c.b16 %v383, %v382
      %v401 = vshrl.u32 %v384, 16
      %v403 = vrot.slane %v401, 7
      %v404 = vshll.u32 %v384, 16
      %v406 = vor.u32 %v403, %v404
      %v408 = vshrl.u32 %v385, 16
      %v410 = vrot.slane %v408, 7
      %v411 = vshll.u32 %v385, 16
      %v413 = vor.u32 %v410, %v411
      %v415 = vshrl.u32 %v386, 16
      %v417 = vrot.slane %v415, 7
      %v418 = vshll.u32 %v386, 16
      %v420 = vor.u32 %v417, %v418
      %v422 = vshrl.u32 %v387, 16
      %v424 = vrot.slane %v422, 7
      %v425 = vshll.u32 %v387, 16
      %v427 = vor.u32 %v424, %v425
      %v429 = vshrl.u32 %v388, 16
      %v431 = vrot.slane %v429, 7
      %v432 = vshll.u32 %v388, 16
      %v434 = vor.u32 %v431, %v432
      %v436 = vshrl.u32 %v389, 16
      %v438 = vrot.slane %v436, 7
      %v439 = vshll.u32 %v389, 16
      %v441 = vor.u32 %v438, %v439
      %v443 = vshrl.u32 %v390, 16
      %v445 = vrot.slane %v443, 7
      %v446 = vshll.u32 %v390, 16
      %v448 = vor.u32 %v445, %v446
      %v450 = vshrl.u32 %v391, 16
      %v452 = vrot.slane %v450, 7
      %v453 = vshll.u32 %v391, 16
      %v455 = vor.u32 %v452, %v453
      %v457 = vshrl.u32 %v392, 16
      %v459 = vrot.slane %v457, 7
      %v460 = vshll.u32 %v392, 16
      %v462 = vor.u32 %v459, %v460
      %v464 = vshrl.u32 %v393, 16
      %v466 = vrot.slane %v464, 7
      %v467 = vshll.u32 %v393, 16
      %v469 = vor.u32 %v466, %v467
      %v471 = vshrl.u32 %v394, 16
      %v473 = vrot.slane %v471, 7
      %v474 = vshll.u32 %v394, 16
      %v476 = vor.u32 %v473, %v474
      %v478 = vshrl.u32 %v395, 16
      %v480 = vrot.slane %v478, 7
      %v481 = vshll.u32 %v395, 16
      %v483 = vor.u32 %v480, %v481
      %v485 = vshrl.u32 %v396, 16
      %v487 = vrot.slane %v485, 7
      %v488 = vshll.u32 %v396, 16
      %v490 = vor.u32 %v487, %v488
      %v492 = vshrl.u32 %v397, 16
      %v494 = vrot.slane %v492, 7
      %v495 = vshll.u32 %v397, 16
      %v497 = vor.u32 %v494, %v495
      %v499 = vshrl.u32 %v398, 16
      %v501 = vrot.slane %v499, 7
      %v502 = vshll.u32 %v398, 16
      %v504 = vor.u32 %v501, %v502
      %v506 = vshrl.u32 %v399, 16
      %v508 = vrot.slane %v506, 7
      %v509 = vshll.u32 %v399, 16
      %v511 = vor.u32 %v508, %v509
      %vm528 = vcmask 1040384
      %vm529 = vsmask.f32 256
      %vm530 = vmand %vm528, %vm529
      %v531 = vsel %vm530, 0, %v406
      %v532 = vsel %vm530, 0, %v413
      %v533 = vsel %vm530, 0, %v420
      %v534 = vsel %vm530, 0, %v427
      %v535 = vsel %vm530, 0, %v434
      %v536 = vsel %vm530, 0, %v441
      %v537 = vsel %vm530, 0, %v448
      %v538 = vsel %vm530, 0, %v455
      %v539 = vsel %vm530, 0, %v462
      %v540 = vsel %vm530, 0, %v469
      %v541 = vsel %vm530, 0, %v476
      %v542 = vsel %vm530, 0, %v483
      %v543 = vsel %vm530, 0, %v490
      %v544 = vsel %vm530, 0, %v497
      %v545 = vsel %vm530, 0, %v504
      %v546 = vsel %vm530, 0, %v511
      %v547 = vrot.slane %v404, 1
      %v548 = vor.u32 %v401, %v547
      %v549 = vrot.slane %v411, 1
      %v550 = vor.u32 %v408, %v549
      %v551 = vrot.slane %v418, 1
      %v552 = vor.u32 %v415, %v551
      %v553 = vrot.slane %v425, 1
      %v554 = vor.u32 %v422, %v553
      %v555 = vrot.slane %v432, 1
      %v556 = vor.u32 %v429, %v555
      %v557 = vrot.slane %v439, 1
      %v558 = vor.u32 %v436, %v557
      %v559 = vrot.slane %v446, 1
      %v560 = vor.u32 %v443, %v559
      %v561 = vrot.slane %v453, 1
      %v562 = vor.u32 %v450, %v561
      %v563 = vrot.slane %v460, 1
      %v564 = vor.u32 %v457, %v563
      %v565 = vrot.slane %v467, 1
      %v566 = vor.u32 %v464, %v565
      %v567 = vrot.slane %v474, 1
      %v568 = vor.u32 %v471, %v567
      %v569 = vrot.slane %v481, 1
      %v570 = vor.u32 %v478, %v569
      %v571 = vrot.slane %v488, 1
      %v572 = vor.u32 %v485, %v571
      %v573 = vrot.slane %v495, 1
      %v574 = vor.u32 %v492, %v573
      %v575 = vrot.slane %v502, 1
      %v576 = vor.u32 %v499, %v575
      %v577 = vrot.slane %v509, 1
      %v578 = vor.u32 %v506, %v577
      %vm595 = vcmask 1047552
      %vm596 = vsmask.f32 7424
      %vm597 = vmand %vm595, %vm596
      %v598 = vsel %vm597, %v548, 0
      %v599 = vsel %vm597, %v550, 0
      %v600 = vsel %vm597, %v552, 0
      %v601 = vsel %vm597, %v554, 0
      %v602 = vsel %vm597, %v556, 0
      %v603 = vsel %vm597, %v558, 0
      %v604 = vsel %vm597, %v560, 0
      %v605 = vsel %vm597, %v562, 0
      %v606 = vsel %vm597, %v564, 0
      %v607 = vsel %vm597, %v566, 0
      %v608 = vsel %vm597, %v568, 0
      %v609 = vsel %vm597, %v570, 0
      %v610 = vsel %vm597, %v572, 0
      %v611 = vsel %vm597, %v574, 0
      %v612 = vsel %vm597, %v576, 0
      %v613 = vsel %vm597, %v578, 0
      %614 = vrot.lane.b32.xlu0 %v384, 4
      %v615 = vpop.permute.xlu0 %614
      %616 = vrot.lane.b32.xlu0 %v385, 4
      %v617 = vpop.permute.xlu0 %616
      %618 = vrot.lane.b32.xlu0 %v386, 4
      %v619 = vpop.permute.xlu0 %618
      %620 = vrot.lane.b32.xlu0 %v387, 4
      %v621 = vpop.permute.xlu0 %620
      %622 = vrot.lane.b32.xlu0 %v388, 4
      %v623 = vpop.permute.xlu0 %622
      %624 = vrot.lane.b32.xlu0 %v389, 4
      %v625 = vpop.permute.xlu0 %624
      %626 = vrot.lane.b32.xlu0 %v390, 4
      %v627 = vpop.permute.xlu0 %626
      %628 = vrot.lane.b32.xlu0 %v391, 4
      %v629 = vpop.permute.xlu0 %628
      %630 = vrot.lane.b32.xlu0 %v392, 4
      %v631 = vpop.permute.xlu0 %630
      %632 = vrot.lane.b32.xlu0 %v393, 4
      %v633 = vpop.permute.xlu0 %632
      %634 = vrot.lane.b32.xlu0 %v394, 4
      %v635 = vpop.permute.xlu0 %634
      %636 = vrot.lane.b32.xlu0 %v395, 4
      %v637 = vpop.permute.xlu0 %636
      %638 = vrot.lane.b32.xlu0 %v396, 4
      %v639 = vpop.permute.xlu0 %638
      %640 = vrot.lane.b32.xlu0 %v397, 4
      %v641 = vpop.permute.xlu0 %640
      %642 = vrot.lane.b32.xlu0 %v398, 4
      %v643 = vpop.permute.xlu0 %642
      %644 = vrot.lane.b32.xlu0 %v399, 4
      %v645 = vpop.permute.xlu0 %644
      %662 = vrot.lane.b32.xlu0 %v598, 8
      %v663 = vpop.permute.xlu0 %662
      %664 = vrot.lane.b32.xlu0 %v599, 8
      %v665 = vpop.permute.xlu0 %664
      %666 = vrot.lane.b32.xlu0 %v600, 8
      %v667 = vpop.permute.xlu0 %666
      %668 = vrot.lane.b32.xlu0 %v601, 8
      %v669 = vpop.permute.xlu0 %668
      %670 = vrot.lane.b32.xlu0 %v602, 8
      %v671 = vpop.permute.xlu0 %670
      %672 = vrot.lane.b32.xlu0 %v603, 8
      %v673 = vpop.permute.xlu0 %672
      %674 = vrot.lane.b32.xlu0 %v604, 8
      %v675 = vpop.permute.xlu0 %674
      %676 = vrot.lane.b32.xlu0 %v605, 8
      %v677 = vpop.permute.xlu0 %676
      %678 = vrot.lane.b32.xlu0 %v606, 8
      %v679 = vpop.permute.xlu0 %678
      %680 = vrot.lane.b32.xlu0 %v607, 8
      %v681 = vpop.permute.xlu0 %680
      %682 = vrot.lane.b32.xlu0 %v608, 8
      %v683 = vpop.permute.xlu0 %682
      %684 = vrot.lane.b32.xlu0 %v609, 8
      %v685 = vpop.permute.xlu0 %684
      %686 = vrot.lane.b32.xlu0 %v610, 8
      %v687 = vpop.permute.xlu0 %686
      %688 = vrot.lane.b32.xlu0 %v611, 8
      %v689 = vpop.permute.xlu0 %688
      %690 = vrot.lane.b32.xlu0 %v612, 8
      %v691 = vpop.permute.xlu0 %690
      %692 = vrot.lane.b32.xlu0 %v613, 8
      %v693 = vpop.permute.xlu0 %692
      %vm694 = vcmask 31744
      %v697 = vsel %vm694, %v531, %v615
      %v700 = vsel %vm694, %v532, %v617
      %v703 = vsel %vm694, %v533, %v619
      %v706 = vsel %vm694, %v534, %v621
      %v709 = vsel %vm694, %v535, %v623
      %v712 = vsel %vm694, %v536, %v625
      %v715 = vsel %vm694, %v537, %v627
      %v718 = vsel %vm694, %v538, %v629
      %v721 = vsel %vm694, %v539, %v631
      %v724 = vsel %vm694, %v540, %v633
      %v727 = vsel %vm694, %v541, %v635
      %v730 = vsel %vm694, %v542, %v637
      %v733 = vsel %vm694, %v543, %v639
      %v736 = vsel %vm694, %v544, %v641
      %v739 = vsel %vm694, %v545, %v643
      %v742 = vsel %vm694, %v546, %v645
      %vm743 = vcmask 64512
      %v745 = vsel %vm743, %v697, %v663
      %v747 = vsel %vm743, %v700, %v665
      %v749 = vsel %vm743, %v703, %v667
      %v751 = vsel %vm743, %v706, %v669
      %v753 = vsel %vm743, %v709, %v671
      %v755 = vsel %vm743, %v712, %v673
      %v757 = vsel %vm743, %v715, %v675
      %v759 = vsel %vm743, %v718, %v677
      %v761 = vsel %vm743, %v721, %v679
      %v763 = vsel %vm743, %v724, %v681
      %v765 = vsel %vm743, %v727, %v683
      %v767 = vsel %vm743, %v730, %v685
      %v769 = vsel %vm743, %v733, %v687
      %v771 = vsel %vm743, %v736, %v689
      %v773 = vsel %vm743, %v739, %v691
      %v775 = vsel %vm743, %v742, %v693
      %v778 = vunpack.c.l.b16 %v280
      %v779 = vunpack.c.l.b16 %v281
      %v780 = vpack.c.b16 %v779, %v778
      %vm781 = vcmask 97280
      %v783 = vsel %vm781, 0, 0
      %v785 = vsel %vm781, %v745, 0
      %v787 = vsel %vm781, %v747, 0
      %v789 = vsel %vm781, %v749, 0
      %v791 = vsel %vm781, %v751, 0
      %v793 = vsel %vm781, %v753, 0
      %v795 = vsel %vm781, %v755, 0
      %v797 = vsel %vm781, %v757, 0
      %v799 = vsel %vm781, %v759, 0
      %v801 = vsel %vm781, %v761, 0
      %v803 = vsel %vm781, %v763, 0
      %v805 = vsel %vm781, %v765, 0
      %v807 = vsel %vm781, %v767, 0
      %v809 = vsel %vm781, %v769, 0
      %v811 = vsel %vm781, %v771, 0
      %v813 = vsel %vm781, %v773, 0
      %v815 = vsel %vm781, %v775, 0
      %vm817 = vcmask 1045504
      %v819 = vsel %vm817, %v780, 0
      %821 = vmatprep.subr.bf16.mxu0 0
      %822 = vmatpush1.bf16.msra.mxu0 %v819
      %823 = vmatprep.subr.bf16.mxu0 0
      %824 = vmatpush1.bf16.msra.mxu0 0
      %825 = vmatprep.subr.bf16.mxu0 0
      %826 = vmatpush1.bf16.msra.mxu0 0
      %827 = vmatprep.subr.bf16.mxu0 0
      %828 = vmatpush1.bf16.msra.mxu0 0
      %829 = vmatprep.subr.bf16.mxu0 0
      %830 = vmatpush1.bf16.msra.mxu0 0
      %831 = vmatprep.subr.bf16.mxu0 0
      %832 = vmatpush1.bf16.msra.mxu0 0
      %833 = vmatprep.subr.bf16.mxu0 0
      %834 = vmatpush1.bf16.msra.mxu0 0
      %835 = vmatprep.subr.bf16.mxu0 0
      %836 = vmatpush1.bf16.msra.mxu0 0
      %837 = vmatprep.subr.bf16.mxu0 0
      %838 = vmatpush1.bf16.msra.mxu0 0
      %839 = vmatprep.subr.bf16.mxu0 0
      %840 = vmatpush1.bf16.msra.mxu0 0
      %841 = vmatprep.subr.bf16.mxu0 0
      %842 = vmatpush1.bf16.msra.mxu0 0
      %843 = vmatprep.subr.bf16.mxu0 0
      %844 = vmatpush1.bf16.msra.mxu0 0
      %845 = vmatprep.subr.bf16.mxu0 0
      %846 = vmatpush1.bf16.msra.mxu0 0
      %847 = vmatprep.subr.bf16.mxu0 0
      %848 = vmatpush1.bf16.msra.mxu0 0
      %849 = vmatprep.subr.bf16.mxu0 0
      %850 = vmatpush1.bf16.msra.mxu0 0
      %851 = vmatprep.subr.bf16.mxu0 0
      %852 = vmatpush1.bf16.msra.mxu0 0
      %853 = vmatprep.mubr.bf16.mxu0 0
      %854 = vmatmul.mubr.bf16.gmra.mrb[0].mxu0 %v783
      %v855 = vpop.f32.mrb[0].mxu0
      %v856 = vadd.f32 0.0, %v855
      %v857 = vpop.f32.mrb[0].mxu0
      %v858 = vpop.f32.mrb[0].mxu0
      %v859 = vadd.f32 0.0, %v858
      %v860 = vpop.f32.mrb[0].mxu0
      %861 = vmatprep.mubr.bf16.mxu0 0
      %862 = vmatmul.mubr.bf16.gmra.mrb[0].mxu0 %v785
      %v863 = vpop.f32.mrb[0].mxu0
      %v864 = vadd.f32 0.0, %v863
      %v865 = vpop.f32.mrb[0].mxu0
      %v866 = vpop.f32.mrb[0].mxu0
      %v867 = vadd.f32 0.0, %v866
      %v868 = vpop.f32.mrb[0].mxu0
      %869 = vmatprep.mubr.bf16.mxu0 0
      %870 = vmatmul.mubr.bf16.gmra.mrb[0].mxu0 %v787
      %v871 = vpop.f32.mrb[0].mxu0
      %v872 = vadd.f32 0.0, %v871
      %v873 = vpop.f32.mrb[0].mxu0
      %v874 = vpop.f32.mrb[0].mxu0
      %v875 = vadd.f32 0.0, %v874
      %v876 = vpop.f32.mrb[0].mxu0
      %877 = vmatprep.mubr.bf16.mxu0 0
      %878 = vmatmul.mubr.bf16.gmra.mrb[0].mxu0 %v789
      %v879 = vpop.f32.mrb[0].mxu0
      %v880 = vadd.f32 0.0, %v879
      %v881 = vpop.f32.mrb[0].mxu0
      %v882 = vpop.f32.mrb[0].mxu0
      %v883 = vadd.f32 0.0, %v882
      %v884 = vpop.f32.mrb[0].mxu0
      %885 = vmatprep.mubr.bf16.mxu0 0
      %886 = vmatmul.mubr.bf16.gmra.mrb[0].mxu0 %v791
      %v887 = vpop.f32.mrb[0].mxu0
      %v888 = vadd.f32 0.0, %v887
      %v889 = vpop.f32.mrb[0].mxu0
      %v890 = vpop.f32.mrb[0].mxu0
      %v891 = vadd.f32 0.0, %v890
      %v892 = vpop.f32.mrb[0].mxu0
      %893 = vmatprep.mubr.bf16.mxu0 0
      %894 = vmatmul.mubr.bf16.gmra.mrb[0].mxu0 %v793
      %v895 = vpop.f32.mrb[0].mxu0
      %v896 = vadd.f32 0.0, %v895
      %v897 = vpop.f32.mrb[0].mxu0
      %v898 = vpop.f32.mrb[0].mxu0
      %v899 = vadd.f32 0.0, %v898
      %v900 = vpop.f32.mrb[0].mxu0
      %901 = vmatprep.mubr.bf16.mxu0 0
      %902 = vmatmul.mubr.bf16.gmra.mrb[0].mxu0 %v795
      %v903 = vpop.f32.mrb[0].mxu0
      %v904 = vadd.f32 0.0, %v903
      %v905 = vpop.f32.mrb[0].mxu0
      %v906 = vpop.f32.mrb[0].mxu0
      %v907 = vadd.f32 0.0, %v906
      %v908 = vpop.f32.mrb[0].mxu0
      %909 = vmatprep.mubr.bf16.mxu0 0
      %910 = vmatmul.mubr.bf16.gmra.mrb[0].mxu0 %v797
      %v911 = vpop.f32.mrb[0].mxu0
      %v912 = vadd.f32 0.0, %v911
      %v913 = vpop.f32.mrb[0].mxu0
      %v914 = vpop.f32.mrb[0].mxu0
      %v915 = vadd.f32 0.0, %v914
      %v916 = vpop.f32.mrb[0].mxu0
      %917 = vmatprep.mubr.bf16.mxu0 0
      %918 = vmatmul.mubr.bf16.gmra.mrb[0].mxu0 %v799
      %v919 = vpop.f32.mrb[0].mxu0
      %v920 = vadd.f32 0.0, %v919
      %v921 = vpop.f32.mrb[0].mxu0
      %v922 = vpop.f32.mrb[0].mxu0
      %v923 = vadd.f32 0.0, %v922
      %v924 = vpop.f32.mrb[0].mxu0
      %925 = vmatprep.mubr.bf16.mxu0 0
      %926 = vmatmul.mubr.bf16.gmra.mrb[0].mxu0 %v801
      %v927 = vpop.f32.mrb[0].mxu0
      %v928 = vadd.f32 0.0, %v927
      %v929 = vpop.f32.mrb[0].mxu0
      %v930 = vpop.f32.mrb[0].mxu0
      %v931 = vadd.f32 0.0, %v930
      %v932 = vpop.f32.mrb[0].mxu0
      %933 = vmatprep.mubr.bf16.mxu0 0
      %934 = vmatmul.mubr.bf16.gmra.mrb[0].mxu0 %v803
      %v935 = vpop.f32.mrb[0].mxu0
      %v936 = vadd.f32 0.0, %v935
      %v937 = vpop.f32.mrb[0].mxu0
      %v938 = vpop.f32.mrb[0].mxu0
      %v939 = vadd.f32 0.0, %v938
      %v940 = vpop.f32.mrb[0].mxu0
      %941 = vmatprep.mubr.bf16.mxu0 0
      %942 = vmatmul.mubr.bf16.gmra.mrb[0].mxu0 %v805
      %v943 = vpop.f32.mrb[0].mxu0
      %v944 = vadd.f32 0.0, %v943
      %v945 = vpop.f32.mrb[0].mxu0
      %v946 = vpop.f32.mrb[0].mxu0
      %v947 = vadd.f32 0.0, %v946
      %v948 = vpop.f32.mrb[0].mxu0
      %949 = vmatprep.mubr.bf16.mxu0 0
      %950 = vmatmul.mubr.bf16.gmra.mrb[0].mxu0 %v807
      %v951 = vpop.f32.mrb[0].mxu0
      %v952 = vadd.f32 0.0, %v951
      %v953 = vpop.f32.mrb[0].mxu0
      %v954 = vpop.f32.mrb[0].mxu0
      %v955 = vadd.f32 0.0, %v954
      %v956 = vpop.f32.mrb[0].mxu0
      %957 = vmatprep.mubr.bf16.mxu0 0
      %958 = vmatmul.mubr.bf16.gmra.mrb[0].mxu0 %v809
      %v959 = vpop.f32.mrb[0].mxu0
      %v960 = vadd.f32 0.0, %v959
      %v961 = vpop.f32.mrb[0].mxu0
      %v962 = vpop.f32.mrb[0].mxu0
      %v963 = vadd.f32 0.0, %v962
      %v964 = vpop.f32.mrb[0].mxu0
      %965 = vmatprep.mubr.bf16.mxu0 0
      %966 = vmatmul.mubr.bf16.gmra.mrb[0].mxu0 %v811
      %v967 = vpop.f32.mrb[0].mxu0
      %v968 = vadd.f32 0.0, %v967
      %v969 = vpop.f32.mrb[0].mxu0
      %v970 = vpop.f32.mrb[0].mxu0
      %v971 = vadd.f32 0.0, %v970
      %v972 = vpop.f32.mrb[0].mxu0
      %973 = vmatprep.mubr.bf16.mxu0 0
      %974 = vmatmul.mubr.bf16.gmra.mrb[0].mxu0 %v813
      %v975 = vpop.f32.mrb[0].mxu0
      %v976 = vadd.f32 0.0, %v975
      %v977 = vpop.f32.mrb[0].mxu0
      %v978 = vpop.f32.mrb[0].mxu0
      %v979 = vadd.f32 0.0, %v978
      %v980 = vpop.f32.mrb[0].mxu0
      %981 = vmatprep.mubr.bf16.mxu0 0
      %982 = vmatmul.mubr.bf16.gmra.mrb[0].mxu0 %v815
      %v983 = vpop.f32.mrb[0].mxu0
      %v984 = vadd.f32 0.0, %v983
      %v985 = vpop.f32.mrb[0].mxu0
      %v986 = vpop.f32.mrb[0].mxu0
      %v987 = vadd.f32 0.0, %v986
      %v988 = vpop.f32.mrb[0].mxu0
      %989 = vmatprep.mubr.bf16.mxu0 0
      %990 = vmatmul.mubr.bf16.gmra.mrb[0].mxu0 %v783
      %v991 = vpop.f32.mrb[0].mxu0
      %v992 = vadd.f32 0.0, %v991
      %v993 = vpop.f32.mrb[0].mxu0
      %v994 = vpop.f32.mrb[0].mxu0
      %v995 = vadd.f32 0.0, %v994
      %v996 = vpop.f32.mrb[0].mxu0
      %997 = vdwg.mxu0
      %1030 = vrot.lane.b32.xlu0 %v864, 124
      %v1031 = vpop.permute.xlu0 %1030
      %1032 = vrot.lane.b32.xlu0 %v867, 124
      %v1033 = vpop.permute.xlu0 %1032
      %1034 = vrot.lane.b32.xlu0 %v872, 124
      %v1035 = vpop.permute.xlu0 %1034
      %1036 = vrot.lane.b32.xlu0 %v875, 124
      %v1037 = vpop.permute.xlu0 %1036
      %1038 = vrot.lane.b32.xlu0 %v880, 124
      %v1039 = vpop.permute.xlu0 %1038
      %1040 = vrot.lane.b32.xlu0 %v883, 124
      %v1041 = vpop.permute.xlu0 %1040
      %1042 = vrot.lane.b32.xlu0 %v888, 124
      %v1043 = vpop.permute.xlu0 %1042
      %1044 = vrot.lane.b32.xlu0 %v891, 124
      %v1045 = vpop.permute.xlu0 %1044
      %1046 = vrot.lane.b32.xlu0 %v896, 124
      %v1047 = vpop.permute.xlu0 %1046
      %1048 = vrot.lane.b32.xlu0 %v899, 124
      %v1049 = vpop.permute.xlu0 %1048
      %1050 = vrot.lane.b32.xlu0 %v904, 124
      %v1051 = vpop.permute.xlu0 %1050
      %1052 = vrot.lane.b32.xlu0 %v907, 124
      %v1053 = vpop.permute.xlu0 %1052
      %1054 = vrot.lane.b32.xlu0 %v912, 124
      %v1055 = vpop.permute.xlu0 %1054
      %1056 = vrot.lane.b32.xlu0 %v915, 124
      %v1057 = vpop.permute.xlu0 %1056
      %1058 = vrot.lane.b32.xlu0 %v920, 124
      %v1059 = vpop.permute.xlu0 %1058
      %1060 = vrot.lane.b32.xlu0 %v923, 124
      %v1061 = vpop.permute.xlu0 %1060
      %1062 = vrot.lane.b32.xlu0 %v928, 124
      %v1063 = vpop.permute.xlu0 %1062
      %1064 = vrot.lane.b32.xlu0 %v931, 124
      %v1065 = vpop.permute.xlu0 %1064
      %1066 = vrot.lane.b32.xlu0 %v936, 124
      %v1067 = vpop.permute.xlu0 %1066
      %1068 = vrot.lane.b32.xlu0 %v939, 124
      %v1069 = vpop.permute.xlu0 %1068
      %1070 = vrot.lane.b32.xlu0 %v944, 124
      %v1071 = vpop.permute.xlu0 %1070
      %1072 = vrot.lane.b32.xlu0 %v947, 124
      %v1073 = vpop.permute.xlu0 %1072
      %1074 = vrot.lane.b32.xlu0 %v952, 124
      %v1075 = vpop.permute.xlu0 %1074
      %1076 = vrot.lane.b32.xlu0 %v955, 124
      %v1077 = vpop.permute.xlu0 %1076
      %1078 = vrot.lane.b32.xlu0 %v960, 124
      %v1079 = vpop.permute.xlu0 %1078
      %1080 = vrot.lane.b32.xlu0 %v963, 124
      %v1081 = vpop.permute.xlu0 %1080
      %1082 = vrot.lane.b32.xlu0 %v968, 124
      %v1083 = vpop.permute.xlu0 %1082
      %1084 = vrot.lane.b32.xlu0 %v971, 124
      %v1085 = vpop.permute.xlu0 %1084
      %1086 = vrot.lane.b32.xlu0 %v976, 124
      %v1087 = vpop.permute.xlu0 %1086
      %1088 = vrot.lane.b32.xlu0 %v979, 124
      %v1089 = vpop.permute.xlu0 %1088
      %1090 = vrot.lane.b32.xlu0 %v984, 124
      %v1091 = vpop.permute.xlu0 %1090
      %1092 = vrot.lane.b32.xlu0 %v987, 124
      %v1093 = vpop.permute.xlu0 %1092
      %v1126 = vadd.f32 %v856, %v1031
      %v1127 = vadd.f32 %v859, %v1033
      %v1128 = vadd.f32 %v864, %v1035
      %v1129 = vadd.f32 %v867, %v1037
      %v1130 = vadd.f32 %v872, %v1039
      %v1131 = vadd.f32 %v875, %v1041
      %v1132 = vadd.f32 %v880, %v1043
      %v1133 = vadd.f32 %v883, %v1045
      %v1134 = vadd.f32 %v888, %v1047
      %v1135 = vadd.f32 %v891, %v1049
      %v1136 = vadd.f32 %v896, %v1051
      %v1137 = vadd.f32 %v899, %v1053
      %v1138 = vadd.f32 %v904, %v1055
      %v1139 = vadd.f32 %v907, %v1057
      %v1140 = vadd.f32 %v912, %v1059
      %v1141 = vadd.f32 %v915, %v1061
      %v1142 = vadd.f32 %v920, %v1063
      %v1143 = vadd.f32 %v923, %v1065
      %v1144 = vadd.f32 %v928, %v1067
      %v1145 = vadd.f32 %v931, %v1069
      %v1146 = vadd.f32 %v936, %v1071
      %v1147 = vadd.f32 %v939, %v1073
      %v1148 = vadd.f32 %v944, %v1075
      %v1149 = vadd.f32 %v947, %v1077
      %v1150 = vadd.f32 %v952, %v1079
      %v1151 = vadd.f32 %v955, %v1081
      %v1152 = vadd.f32 %v960, %v1083
      %v1153 = vadd.f32 %v963, %v1085
      %v1154 = vadd.f32 %v968, %v1087
      %v1155 = vadd.f32 %v971, %v1089
      %v1156 = vadd.f32 %v976, %v1091
      %v1157 = vadd.f32 %v979, %v1093
      %1160 = vrot.lane.b32.xlu0 %v872, 120
      %v1161 = vpop.permute.xlu0 %1160
      %1162 = vrot.lane.b32.xlu0 %v875, 120
      %v1163 = vpop.permute.xlu0 %1162
      %1164 = vrot.lane.b32.xlu0 %v880, 120
      %v1165 = vpop.permute.xlu0 %1164
      %1166 = vrot.lane.b32.xlu0 %v883, 120
      %v1167 = vpop.permute.xlu0 %1166
      %1168 = vrot.lane.b32.xlu0 %v888, 120
      %v1169 = vpop.permute.xlu0 %1168
      %1170 = vrot.lane.b32.xlu0 %v891, 120
      %v1171 = vpop.permute.xlu0 %1170
      %1172 = vrot.lane.b32.xlu0 %v896, 120
      %v1173 = vpop.permute.xlu0 %1172
      %1174 = vrot.lane.b32.xlu0 %v899, 120
      %v1175 = vpop.permute.xlu0 %1174
      %1176 = vrot.lane.b32.xlu0 %v904, 120
      %v1177 = vpop.permute.xlu0 %1176
      %1178 = vrot.lane.b32.xlu0 %v907, 120
      %v1179 = vpop.permute.xlu0 %1178
      %1180 = vrot.lane.b32.xlu0 %v912, 120
      %v1181 = vpop.permute.xlu0 %1180
      %1182 = vrot.lane.b32.xlu0 %v915, 120
      %v1183 = vpop.permute.xlu0 %1182
      %1184 = vrot.lane.b32.xlu0 %v920, 120
      %v1185 = vpop.permute.xlu0 %1184
      %1186 = vrot.lane.b32.xlu0 %v923, 120
      %v1187 = vpop.permute.xlu0 %1186
      %1188 = vrot.lane.b32.xlu0 %v928, 120
      %v1189 = vpop.permute.xlu0 %1188
      %1190 = vrot.lane.b32.xlu0 %v931, 120
      %v1191 = vpop.permute.xlu0 %1190
      %1192 = vrot.lane.b32.xlu0 %v936, 120
      %v1193 = vpop.permute.xlu0 %1192
      %1194 = vrot.lane.b32.xlu0 %v939, 120
      %v1195 = vpop.permute.xlu0 %1194
      %1196 = vrot.lane.b32.xlu0 %v944, 120
      %v1197 = vpop.permute.xlu0 %1196
      %1198 = vrot.lane.b32.xlu0 %v947, 120
      %v1199 = vpop.permute.xlu0 %1198
      %1200 = vrot.lane.b32.xlu0 %v952, 120
      %v1201 = vpop.permute.xlu0 %1200
      %1202 = vrot.lane.b32.xlu0 %v955, 120
      %v1203 = vpop.permute.xlu0 %1202
      %1204 = vrot.lane.b32.xlu0 %v960, 120
      %v1205 = vpop.permute.xlu0 %1204
      %1206 = vrot.lane.b32.xlu0 %v963, 120
      %v1207 = vpop.permute.xlu0 %1206
      %1208 = vrot.lane.b32.xlu0 %v968, 120
      %v1209 = vpop.permute.xlu0 %1208
      %1210 = vrot.lane.b32.xlu0 %v971, 120
      %v1211 = vpop.permute.xlu0 %1210
      %1212 = vrot.lane.b32.xlu0 %v976, 120
      %v1213 = vpop.permute.xlu0 %1212
      %1214 = vrot.lane.b32.xlu0 %v979, 120
      %v1215 = vpop.permute.xlu0 %1214
      %1216 = vrot.lane.b32.xlu0 %v984, 120
      %v1217 = vpop.permute.xlu0 %1216
      %1218 = vrot.lane.b32.xlu0 %v987, 120
      %v1219 = vpop.permute.xlu0 %1218
      %1220 = vrot.lane.b32.xlu0 %v992, 120
      %v1221 = vpop.permute.xlu0 %1220
      %1222 = vrot.lane.b32.xlu0 %v995, 120
      %v1223 = vpop.permute.xlu0 %1222
      %v1256 = vadd.f32 %v1126, %v1161
      %v1257 = vadd.f32 %v1127, %v1163
      %v1258 = vadd.f32 %v1128, %v1165
      %v1259 = vadd.f32 %v1129, %v1167
      %v1260 = vadd.f32 %v1130, %v1169
      %v1261 = vadd.f32 %v1131, %v1171
      %v1262 = vadd.f32 %v1132, %v1173
      %v1263 = vadd.f32 %v1133, %v1175
      %v1264 = vadd.f32 %v1134, %v1177
      %v1265 = vadd.f32 %v1135, %v1179
      %v1266 = vadd.f32 %v1136, %v1181
      %v1267 = vadd.f32 %v1137, %v1183
      %v1268 = vadd.f32 %v1138, %v1185
      %v1269 = vadd.f32 %v1139, %v1187
      %v1270 = vadd.f32 %v1140, %v1189
      %v1271 = vadd.f32 %v1141, %v1191
      %v1272 = vadd.f32 %v1142, %v1193
      %v1273 = vadd.f32 %v1143, %v1195
      %v1274 = vadd.f32 %v1144, %v1197
      %v1275 = vadd.f32 %v1145, %v1199
      %v1276 = vadd.f32 %v1146, %v1201
      %v1277 = vadd.f32 %v1147, %v1203
      %v1278 = vadd.f32 %v1148, %v1205
      %v1279 = vadd.f32 %v1149, %v1207
      %v1280 = vadd.f32 %v1150, %v1209
      %v1281 = vadd.f32 %v1151, %v1211
      %v1282 = vadd.f32 %v1152, %v1213
      %v1283 = vadd.f32 %v1153, %v1215
      %v1284 = vadd.f32 %v1154, %v1217
      %v1285 = vadd.f32 %v1155, %v1219
      %v1286 = vadd.f32 %v1156, %v1221
      %v1287 = vadd.f32 %v1157, %v1223
      %v1289 = vlaneseq
      %v1290 = vshrl.u32 %v1289, 7
      %v1291 = vsub.s32 0, %v1290
      %v1292 = vrot.slane %v284, %v1291
      %v1294 = vmul.f32 %v1256, %v1292
      %v1295 = vmul.f32 %v1257, %v1292
      %v1296 = vmul.f32 %v1258, %v1292
      %v1297 = vmul.f32 %v1259, %v1292
      %v1298 = vmul.f32 %v1260, %v1292
      %v1299 = vmul.f32 %v1261, %v1292
      %v1300 = vmul.f32 %v1262, %v1292
      %v1301 = vmul.f32 %v1263, %v1292
      %v1302 = vmul.f32 %v1264, %v1292
      %v1303 = vmul.f32 %v1265, %v1292
      %v1304 = vmul.f32 %v1266, %v1292
      %v1305 = vmul.f32 %v1267, %v1292
      %v1306 = vmul.f32 %v1268, %v1292
      %v1307 = vmul.f32 %v1269, %v1292
      %v1308 = vmul.f32 %v1270, %v1292
      %v1309 = vmul.f32 %v1271, %v1292
      %v1310 = vmul.f32 %v1272, %v1292
      %v1311 = vmul.f32 %v1273, %v1292
      %v1312 = vmul.f32 %v1274, %v1292
      %v1313 = vmul.f32 %v1275, %v1292
      %v1314 = vmul.f32 %v1276, %v1292
      %v1315 = vmul.f32 %v1277, %v1292
      %v1316 = vmul.f32 %v1278, %v1292
      %v1317 = vmul.f32 %v1279, %v1292
      %v1318 = vmul.f32 %v1280, %v1292
      %v1319 = vmul.f32 %v1281, %v1292
      %v1320 = vmul.f32 %v1282, %v1292
      %v1321 = vmul.f32 %v1283, %v1292
      %v1322 = vmul.f32 %v1284, %v1292
      %v1323 = vmul.f32 %v1285, %v1292
      %v1324 = vmul.f32 %v1286, %v1292
      %v1325 = vmul.f32 %v1287, %v1292
      %v1327 = vlaneseq
      %v1328 = vshrl.u32 %v1327, 7
      %v1329 = vsub.s32 0, %v1328
      %v1330 = vrot.slane %v285, %v1329
      %v1332 = vadd.f32 %v1294, %v1330
      %v1333 = vadd.f32 %v1295, %v1330
      %v1334 = vadd.f32 %v1296, %v1330
      %v1335 = vadd.f32 %v1297, %v1330
      %v1336 = vadd.f32 %v1298, %v1330
      %v1337 = vadd.f32 %v1299, %v1330
      %v1338 = vadd.f32 %v1300, %v1330
      %v1339 = vadd.f32 %v1301, %v1330
      %v1340 = vadd.f32 %v1302, %v1330
      %v1341 = vadd.f32 %v1303, %v1330
      %v1342 = vadd.f32 %v1304, %v1330
      %v1343 = vadd.f32 %v1305, %v1330
      %v1344 = vadd.f32 %v1306, %v1330
      %v1345 = vadd.f32 %v1307, %v1330
      %v1346 = vadd.f32 %v1308, %v1330
      %v1347 = vadd.f32 %v1309, %v1330
      %v1348 = vadd.f32 %v1310, %v1330
      %v1349 = vadd.f32 %v1311, %v1330
      %v1350 = vadd.f32 %v1312, %v1330
      %v1351 = vadd.f32 %v1313, %v1330
      %v1352 = vadd.f32 %v1314, %v1330
      %v1353 = vadd.f32 %v1315, %v1330
      %v1354 = vadd.f32 %v1316, %v1330
      %v1355 = vadd.f32 %v1317, %v1330
      %v1356 = vadd.f32 %v1318, %v1330
      %v1357 = vadd.f32 %v1319, %v1330
      %v1358 = vadd.f32 %v1320, %v1330
      %v1359 = vadd.f32 %v1321, %v1330
      %v1360 = vadd.f32 %v1322, %v1330
      %v1361 = vadd.f32 %v1323, %v1330
      %v1362 = vadd.f32 %v1324, %v1330
      %v1363 = vadd.f32 %v1325, %v1330
      %v1364 = vmax.f32 %v1332, 0.0
      %v1365 = vmax.f32 %v1333, 0.0
      %v1366 = vmax.f32 %v1334, 0.0
      %v1367 = vmax.f32 %v1335, 0.0
      %v1368 = vmax.f32 %v1336, 0.0
      %v1369 = vmax.f32 %v1337, 0.0
      %v1370 = vmax.f32 %v1338, 0.0
      %v1371 = vmax.f32 %v1339, 0.0
      %v1372 = vmax.f32 %v1340, 0.0
      %v1373 = vmax.f32 %v1341, 0.0
      %v1374 = vmax.f32 %v1342, 0.0
      %v1375 = vmax.f32 %v1343, 0.0
      %v1376 = vmax.f32 %v1344, 0.0
      %v1377 = vmax.f32 %v1345, 0.0
      %v1378 = vmax.f32 %v1346, 0.0
      %v1379 = vmax.f32 %v1347, 0.0
      %v1380 = vmax.f32 %v1348, 0.0
      %v1381 = vmax.f32 %v1349, 0.0
      %v1382 = vmax.f32 %v1350, 0.0
      %v1383 = vmax.f32 %v1351, 0.0
      %v1384 = vmax.f32 %v1352, 0.0
      %v1385 = vmax.f32 %v1353, 0.0
      %v1386 = vmax.f32 %v1354, 0.0
      %v1387 = vmax.f32 %v1355, 0.0
      %v1388 = vmax.f32 %v1356, 0.0
      %v1389 = vmax.f32 %v1357, 0.0
      %v1390 = vmax.f32 %v1358, 0.0
      %v1391 = vmax.f32 %v1359, 0.0
      %v1392 = vmax.f32 %v1360, 0.0
      %v1393 = vmax.f32 %v1361, 0.0
      %v1394 = vmax.f32 %v1362, 0.0
      %v1395 = vmax.f32 %v1363, 0.0
      %v1396 = vpack.c.bf16 %v1365, %v1364
      %v1397 = vpack.c.bf16 %v1367, %v1366
      %v1398 = vpack.c.bf16 %v1369, %v1368
      %v1399 = vpack.c.bf16 %v1371, %v1370
      %v1400 = vpack.c.bf16 %v1373, %v1372
      %v1401 = vpack.c.bf16 %v1375, %v1374
      %v1402 = vpack.c.bf16 %v1377, %v1376
      %v1403 = vpack.c.bf16 %v1379, %v1378
      %v1404 = vpack.c.bf16 %v1381, %v1380
      %v1405 = vpack.c.bf16 %v1383, %v1382
      %v1406 = vpack.c.bf16 %v1385, %v1384
      %v1407 = vpack.c.bf16 %v1387, %v1386
      %v1408 = vpack.c.bf16 %v1389, %v1388
      %v1409 = vpack.c.bf16 %v1391, %v1390
      %v1410 = vpack.c.bf16 %v1393, %v1392
      %v1411 = vpack.c.bf16 %v1395, %v1394
      %v1413 = vshrl.u32 %v1396, 16
      %v1415 = vrot.slane %v1413, 7
      %v1416 = vshll.u32 %v1396, 16
      %v1418 = vor.u32 %v1415, %v1416
      %v1420 = vshrl.u32 %v1397, 16
      %v1422 = vrot.slane %v1420, 7
      %v1423 = vshll.u32 %v1397, 16
      %v1425 = vor.u32 %v1422, %v1423
      %v1427 = vshrl.u32 %v1398, 16
      %v1429 = vrot.slane %v1427, 7
      %v1430 = vshll.u32 %v1398, 16
      %v1432 = vor.u32 %v1429, %v1430
      %v1434 = vshrl.u32 %v1399, 16
      %v1436 = vrot.slane %v1434, 7
      %v1437 = vshll.u32 %v1399, 16
      %v1439 = vor.u32 %v1436, %v1437
      %v1441 = vshrl.u32 %v1400, 16
      %v1443 = vrot.slane %v1441, 7
      %v1444 = vshll.u32 %v1400, 16
      %v1446 = vor.u32 %v1443, %v1444
      %v1448 = vshrl.u32 %v1401, 16
      %v1450 = vrot.slane %v1448, 7
      %v1451 = vshll.u32 %v1401, 16
      %v1453 = vor.u32 %v1450, %v1451
      %v1455 = vshrl.u32 %v1402, 16
      %v1457 = vrot.slane %v1455, 7
      %v1458 = vshll.u32 %v1402, 16
      %v1460 = vor.u32 %v1457, %v1458
      %v1462 = vshrl.u32 %v1403, 16
      %v1464 = vrot.slane %v1462, 7
      %v1465 = vshll.u32 %v1403, 16
      %v1467 = vor.u32 %v1464, %v1465
      %v1469 = vshrl.u32 %v1404, 16
      %v1471 = vrot.slane %v1469, 7
      %v1472 = vshll.u32 %v1404, 16
      %v1474 = vor.u32 %v1471, %v1472
      %v1476 = vshrl.u32 %v1405, 16
      %v1478 = vrot.slane %v1476, 7
      %v1479 = vshll.u32 %v1405, 16
      %v1481 = vor.u32 %v1478, %v1479
      %v1483 = vshrl.u32 %v1406, 16
      %v1485 = vrot.slane %v1483, 7
      %v1486 = vshll.u32 %v1406, 16
      %v1488 = vor.u32 %v1485, %v1486
      %v1490 = vshrl.u32 %v1407, 16
      %v1492 = vrot.slane %v1490, 7
      %v1493 = vshll.u32 %v1407, 16
      %v1495 = vor.u32 %v1492, %v1493
      %v1497 = vshrl.u32 %v1408, 16
      %v1499 = vrot.slane %v1497, 7
      %v1500 = vshll.u32 %v1408, 16
      %v1502 = vor.u32 %v1499, %v1500
      %v1504 = vshrl.u32 %v1409, 16
      %v1506 = vrot.slane %v1504, 7
      %v1507 = vshll.u32 %v1409, 16
      %v1509 = vor.u32 %v1506, %v1507
      %v1511 = vshrl.u32 %v1410, 16
      %v1513 = vrot.slane %v1511, 7
      %v1514 = vshll.u32 %v1410, 16
      %v1516 = vor.u32 %v1513, %v1514
      %v1518 = vshrl.u32 %v1411, 16
      %v1520 = vrot.slane %v1518, 7
      %v1521 = vshll.u32 %v1411, 16
      %v1523 = vor.u32 %v1520, %v1521
      %v1540 = vsel %vm530, 0, %v1418
      %v1541 = vsel %vm530, 0, %v1425
      %v1542 = vsel %vm530, 0, %v1432
      %v1543 = vsel %vm530, 0, %v1439
      %v1544 = vsel %vm530, 0, %v1446
      %v1545 = vsel %vm530, 0, %v1453
      %v1546 = vsel %vm530, 0, %v1460
      %v1547 = vsel %vm530, 0, %v1467
      %v1548 = vsel %vm530, 0, %v1474
      %v1549 = vsel %vm530, 0, %v1481
      %v1550 = vsel %vm530, 0, %v1488
      %v1551 = vsel %vm530, 0, %v1495
      %v1552 = vsel %vm530, 0, %v1502
      %v1553 = vsel %vm530, 0, %v1509
      %v1554 = vsel %vm530, 0, %v1516
      %v1555 = vsel %vm530, 0, %v1523
      %v1556 = vrot.slane %v1416, 1
      %v1557 = vor.u32 %v1413, %v1556
      %v1558 = vrot.slane %v1423, 1
      %v1559 = vor.u32 %v1420, %v1558
      %v1560 = vrot.slane %v1430, 1
      %v1561 = vor.u32 %v1427, %v1560
      %v1562 = vrot.slane %v1437, 1
      %v1563 = vor.u32 %v1434, %v1562
      %v1564 = vrot.slane %v1444, 1
      %v1565 = vor.u32 %v1441, %v1564
      %v1566 = vrot.slane %v1451, 1
      %v1567 = vor.u32 %v1448, %v1566
      %v1568 = vrot.slane %v1458, 1
      %v1569 = vor.u32 %v1455, %v1568
      %v1570 = vrot.slane %v1465, 1
      %v1571 = vor.u32 %v1462, %v1570
      %v1572 = vrot.slane %v1472, 1
      %v1573 = vor.u32 %v1469, %v1572
      %v1574 = vrot.slane %v1479, 1
      %v1575 = vor.u32 %v1476, %v1574
      %v1576 = vrot.slane %v1486, 1
      %v1577 = vor.u32 %v1483, %v1576
      %v1578 = vrot.slane %v1493, 1
      %v1579 = vor.u32 %v1490, %v1578
      %v1580 = vrot.slane %v1500, 1
      %v1581 = vor.u32 %v1497, %v1580
      %v1582 = vrot.slane %v1507, 1
      %v1583 = vor.u32 %v1504, %v1582
      %v1584 = vrot.slane %v1514, 1
      %v1585 = vor.u32 %v1511, %v1584
      %v1586 = vrot.slane %v1521, 1
      %v1587 = vor.u32 %v1518, %v1586
      %v1604 = vsel %vm597, %v1557, 0
      %v1605 = vsel %vm597, %v1559, 0
      %v1606 = vsel %vm597, %v1561, 0
      %v1607 = vsel %vm597, %v1563, 0
      %v1608 = vsel %vm597, %v1565, 0
      %v1609 = vsel %vm597, %v1567, 0
      %v1610 = vsel %vm597, %v1569, 0
      %v1611 = vsel %vm597, %v1571, 0
      %v1612 = vsel %vm597, %v1573, 0
      %v1613 = vsel %vm597, %v1575, 0
      %v1614 = vsel %vm597, %v1577, 0
      %v1615 = vsel %vm597, %v1579, 0
      %v1616 = vsel %vm597, %v1581, 0
      %v1617 = vsel %vm597, %v1583, 0
      %v1618 = vsel %vm597, %v1585, 0
      %v1619 = vsel %vm597, %v1587, 0
      %1636 = vrot.lane.b32.xlu0 %v1396, 4
      %v1637 = vpop.permute.xlu0 %1636
      %1638 = vrot.lane.b32.xlu0 %v1397, 4
      %v1639 = vpop.permute.xlu0 %1638
      %1640 = vrot.lane.b32.xlu0 %v1398, 4
      %v1641 = vpop.permute.xlu0 %1640
      %1642 = vrot.lane.b32.xlu0 %v1399, 4
      %v1643 = vpop.permute.xlu0 %1642
      %1644 = vrot.lane.b32.xlu0 %v1400, 4
      %v1645 = vpop.permute.xlu0 %1644
      %1646 = vrot.lane.b32.xlu0 %v1401, 4
      %v1647 = vpop.permute.xlu0 %1646
      %1648 = vrot.lane.b32.xlu0 %v1402, 4
      %v1649 = vpop.permute.xlu0 %1648
      %1650 = vrot.lane.b32.xlu0 %v1403, 4
      %v1651 = vpop.permute.xlu0 %1650
      %1652 = vrot.lane.b32.xlu0 %v1404, 4
      %v1653 = vpop.permute.xlu0 %1652
      %1654 = vrot.lane.b32.xlu0 %v1405, 4
      %v1655 = vpop.permute.xlu0 %1654
      %1656 = vrot.lane.b32.xlu0 %v1406, 4
      %v1657 = vpop.permute.xlu0 %1656
      %1658 = vrot.lane.b32.xlu0 %v1407, 4
      %v1659 = vpop.permute.xlu0 %1658
      %1660 = vrot.lane.b32.xlu0 %v1408, 4
      %v1661 = vpop.permute.xlu0 %1660
      %1662 = vrot.lane.b32.xlu0 %v1409, 4
      %v1663 = vpop.permute.xlu0 %1662
      %1664 = vrot.lane.b32.xlu0 %v1410, 4
      %v1665 = vpop.permute.xlu0 %1664
      %1666 = vrot.lane.b32.xlu0 %v1411, 4
      %v1667 = vpop.permute.xlu0 %1666
      %1684 = vrot.lane.b32.xlu0 %v1604, 8
      %v1685 = vpop.permute.xlu0 %1684
      %1686 = vrot.lane.b32.xlu0 %v1605, 8
      %v1687 = vpop.permute.xlu0 %1686
      %1688 = vrot.lane.b32.xlu0 %v1606, 8
      %v1689 = vpop.permute.xlu0 %1688
      %1690 = vrot.lane.b32.xlu0 %v1607, 8
      %v1691 = vpop.permute.xlu0 %1690
      %1692 = vrot.lane.b32.xlu0 %v1608, 8
      %v1693 = vpop.permute.xlu0 %1692
      %1694 = vrot.lane.b32.xlu0 %v1609, 8
      %v1695 = vpop.permute.xlu0 %1694
      %1696 = vrot.lane.b32.xlu0 %v1610, 8
      %v1697 = vpop.permute.xlu0 %1696
      %1698 = vrot.lane.b32.xlu0 %v1611, 8
      %v1699 = vpop.permute.xlu0 %1698
      %1700 = vrot.lane.b32.xlu0 %v1612, 8
      %v1701 = vpop.permute.xlu0 %1700
      %1702 = vrot.lane.b32.xlu0 %v1613, 8
      %v1703 = vpop.permute.xlu0 %1702
      %1704 = vrot.lane.b32.xlu0 %v1614, 8
      %v1705 = vpop.permute.xlu0 %1704
      %1706 = vrot.lane.b32.xlu0 %v1615, 8
      %v1707 = vpop.permute.xlu0 %1706
      %1708 = vrot.lane.b32.xlu0 %v1616, 8
      %v1709 = vpop.permute.xlu0 %1708
      %1710 = vrot.lane.b32.xlu0 %v1617, 8
      %v1711 = vpop.permute.xlu0 %1710
      %1712 = vrot.lane.b32.xlu0 %v1618, 8
      %v1713 = vpop.permute.xlu0 %1712
      %1714 = vrot.lane.b32.xlu0 %v1619, 8
      %v1715 = vpop.permute.xlu0 %1714
      %v1718 = vsel %vm694, %v1540, %v1637
      %v1721 = vsel %vm694, %v1541, %v1639
      %v1724 = vsel %vm694, %v1542, %v1641
      %v1727 = vsel %vm694, %v1543, %v1643
      %v1730 = vsel %vm694, %v1544, %v1645
      %v1733 = vsel %vm694, %v1545, %v1647
      %v1736 = vsel %vm694, %v1546, %v1649
      %v1739 = vsel %vm694, %v1547, %v1651
      %v1742 = vsel %vm694, %v1548, %v1653
      %v1745 = vsel %vm694, %v1549, %v1655
      %v1748 = vsel %vm694, %v1550, %v1657
      %v1751 = vsel %vm694, %v1551, %v1659
      %v1754 = vsel %vm694, %v1552, %v1661
      %v1757 = vsel %vm694, %v1553, %v1663
      %v1760 = vsel %vm694, %v1554, %v1665
      %v1763 = vsel %vm694, %v1555, %v1667
      %v1765 = vsel %vm743, %v1718, %v1685
      %v1767 = vsel %vm743, %v1721, %v1687
      %v1769 = vsel %vm743, %v1724, %v1689
      %v1771 = vsel %vm743, %v1727, %v1691
      %v1773 = vsel %vm743, %v1730, %v1693
      %v1775 = vsel %vm743, %v1733, %v1695
      %v1777 = vsel %vm743, %v1736, %v1697
      %v1779 = vsel %vm743, %v1739, %v1699
      %v1781 = vsel %vm743, %v1742, %v1701
      %v1783 = vsel %vm743, %v1745, %v1703
      %v1785 = vsel %vm743, %v1748, %v1705
      %v1787 = vsel %vm743, %v1751, %v1707
      %v1789 = vsel %vm743, %v1754, %v1709
      %v1791 = vsel %vm743, %v1757, %v1711
      %v1793 = vsel %vm743, %v1760, %v1713
      %v1795 = vsel %vm743, %v1763, %v1715
      %v1798 = vunpack.c.l.b16 %v282
      %v1799 = vunpack.c.l.b16 %v283
      %v1800 = vpack.c.b16 %v1799, %v1798
      %v1801 = vsel %vm781, %v1765, 0
      %v1803 = vsel %vm781, %v1767, 0
      %v1805 = vsel %vm781, %v1769, 0
      %v1807 = vsel %vm781, %v1771, 0
      %v1809 = vsel %vm781, %v1773, 0
      %v1811 = vsel %vm781, %v1775, 0
      %v1813 = vsel %vm781, %v1777, 0
      %v1815 = vsel %vm781, %v1779, 0
      %v1817 = vsel %vm781, %v1781, 0
      %v1819 = vsel %vm781, %v1783, 0
      %v1821 = vsel %vm781, %v1785, 0
      %v1823 = vsel %vm781, %v1787, 0
      %v1825 = vsel %vm781, %v1789, 0
      %v1827 = vsel %vm781, %v1791, 0
      %v1829 = vsel %vm781, %v1793, 0
      %v1831 = vsel %vm781, %v1795, 0
      %v1834 = vsel %vm817, %v1800, 0
      %1836 = vmatprep.subr.bf16.mxu0 0
      %1837 = vmatpush1.bf16.msra.mxu0 %v1834
      %1838 = vmatprep.subr.bf16.mxu0 0
      %1839 = vmatpush1.bf16.msra.mxu0 0
      %1840 = vmatprep.subr.bf16.mxu0 0
      %1841 = vmatpush1.bf16.msra.mxu0 0
      %1842 = vmatprep.subr.bf16.mxu0 0
      %1843 = vmatpush1.bf16.msra.mxu0 0
      %1844 = vmatprep.subr.bf16.mxu0 0
      %1845 = vmatpush1.bf16.msra.mxu0 0
      %1846 = vmatprep.subr.bf16.mxu0 0
      %1847 = vmatpush1.bf16.msra.mxu0 0
      %1848 = vmatprep.subr.bf16.mxu0 0
      %1849 = vmatpush1.bf16.msra.mxu0 0
      %1850 = vmatprep.subr.bf16.mxu0 0
      %1851 = vmatpush1.bf16.msra.mxu0 0
      %1852 = vmatprep.subr.bf16.mxu0 0
      %1853 = vmatpush1.bf16.msra.mxu0 0
      %1854 = vmatprep.subr.bf16.mxu0 0
      %1855 = vmatpush1.bf16.msra.mxu0 0
      %1856 = vmatprep.subr.bf16.mxu0 0
      %1857 = vmatpush1.bf16.msra.mxu0 0
      %1858 = vmatprep.subr.bf16.mxu0 0
      %1859 = vmatpush1.bf16.msra.mxu0 0
      %1860 = vmatprep.subr.bf16.mxu0 0
      %1861 = vmatpush1.bf16.msra.mxu0 0
      %1862 = vmatprep.subr.bf16.mxu0 0
      %1863 = vmatpush1.bf16.msra.mxu0 0
      %1864 = vmatprep.subr.bf16.mxu0 0
      %1865 = vmatpush1.bf16.msra.mxu0 0
      %1866 = vmatprep.subr.bf16.mxu0 0
      %1867 = vmatpush1.bf16.msra.mxu0 0
      %1868 = vmatprep.mubr.bf16.mxu0 0
      %1869 = vmatmul.mubr.bf16.gmra.mrb[0].mxu0 %v783
      %v1870 = vpop.f32.mrb[0].mxu0
      %v1871 = vadd.f32 0.0, %v1870
      %v1872 = vpop.f32.mrb[0].mxu0
      %v1873 = vpop.f32.mrb[0].mxu0
      %v1874 = vadd.f32 0.0, %v1873
      %v1875 = vpop.f32.mrb[0].mxu0
      %1876 = vmatprep.mubr.bf16.mxu0 0
      %1877 = vmatmul.mubr.bf16.gmra.mrb[0].mxu0 %v1801
      %v1878 = vpop.f32.mrb[0].mxu0
      %v1879 = vadd.f32 0.0, %v1878
      %v1880 = vpop.f32.mrb[0].mxu0
      %v1881 = vpop.f32.mrb[0].mxu0
      %v1882 = vadd.f32 0.0, %v1881
      %v1883 = vpop.f32.mrb[0].mxu0
      %1884 = vmatprep.mubr.bf16.mxu0 0
      %1885 = vmatmul.mubr.bf16.gmra.mrb[0].mxu0 %v1803
      %v1886 = vpop.f32.mrb[0].mxu0
      %v1887 = vadd.f32 0.0, %v1886
      %v1888 = vpop.f32.mrb[0].mxu0
      %v1889 = vpop.f32.mrb[0].mxu0
      %v1890 = vadd.f32 0.0, %v1889
      %v1891 = vpop.f32.mrb[0].mxu0
      %1892 = vmatprep.mubr.bf16.mxu0 0
      %1893 = vmatmul.mubr.bf16.gmra.mrb[0].mxu0 %v1805
      %v1894 = vpop.f32.mrb[0].mxu0
      %v1895 = vadd.f32 0.0, %v1894
      %v1896 = vpop.f32.mrb[0].mxu0
      %v1897 = vpop.f32.mrb[0].mxu0
      %v1898 = vadd.f32 0.0, %v1897
      %v1899 = vpop.f32.mrb[0].mxu0
      %1900 = vmatprep.mubr.bf16.mxu0 0
      %1901 = vmatmul.mubr.bf16.gmra.mrb[0].mxu0 %v1807
      %v1902 = vpop.f32.mrb[0].mxu0
      %v1903 = vadd.f32 0.0, %v1902
      %v1904 = vpop.f32.mrb[0].mxu0
      %v1905 = vpop.f32.mrb[0].mxu0
      %v1906 = vadd.f32 0.0, %v1905
      %v1907 = vpop.f32.mrb[0].mxu0
      %1908 = vmatprep.mubr.bf16.mxu0 0
      %1909 = vmatmul.mubr.bf16.gmra.mrb[0].mxu0 %v1809
      %v1910 = vpop.f32.mrb[0].mxu0
      %v1911 = vadd.f32 0.0, %v1910
      %v1912 = vpop.f32.mrb[0].mxu0
      %v1913 = vpop.f32.mrb[0].mxu0
      %v1914 = vadd.f32 0.0, %v1913
      %v1915 = vpop.f32.mrb[0].mxu0
      %1916 = vmatprep.mubr.bf16.mxu0 0
      %1917 = vmatmul.mubr.bf16.gmra.mrb[0].mxu0 %v1811
      %v1918 = vpop.f32.mrb[0].mxu0
      %v1919 = vadd.f32 0.0, %v1918
      %v1920 = vpop.f32.mrb[0].mxu0
      %v1921 = vpop.f32.mrb[0].mxu0
      %v1922 = vadd.f32 0.0, %v1921
      %v1923 = vpop.f32.mrb[0].mxu0
      %1924 = vmatprep.mubr.bf16.mxu0 0
      %1925 = vmatmul.mubr.bf16.gmra.mrb[0].mxu0 %v1813
      %v1926 = vpop.f32.mrb[0].mxu0
      %v1927 = vadd.f32 0.0, %v1926
      %v1928 = vpop.f32.mrb[0].mxu0
      %v1929 = vpop.f32.mrb[0].mxu0
      %v1930 = vadd.f32 0.0, %v1929
      %v1931 = vpop.f32.mrb[0].mxu0
      %1932 = vmatprep.mubr.bf16.mxu0 0
      %1933 = vmatmul.mubr.bf16.gmra.mrb[0].mxu0 %v1815
      %v1934 = vpop.f32.mrb[0].mxu0
      %v1935 = vadd.f32 0.0, %v1934
      %v1936 = vpop.f32.mrb[0].mxu0
      %v1937 = vpop.f32.mrb[0].mxu0
      %v1938 = vadd.f32 0.0, %v1937
      %v1939 = vpop.f32.mrb[0].mxu0
      %1940 = vmatprep.mubr.bf16.mxu0 0
      %1941 = vmatmul.mubr.bf16.gmra.mrb[0].mxu0 %v1817
      %v1942 = vpop.f32.mrb[0].mxu0
      %v1943 = vadd.f32 0.0, %v1942
      %v1944 = vpop.f32.mrb[0].mxu0
      %v1945 = vpop.f32.mrb[0].mxu0
      %v1946 = vadd.f32 0.0, %v1945
      %v1947 = vpop.f32.mrb[0].mxu0
      %1948 = vmatprep.mubr.bf16.mxu0 0
      %1949 = vmatmul.mubr.bf16.gmra.mrb[0].mxu0 %v1819
      %v1950 = vpop.f32.mrb[0].mxu0
      %v1951 = vadd.f32 0.0, %v1950
      %v1952 = vpop.f32.mrb[0].mxu0
      %v1953 = vpop.f32.mrb[0].mxu0
      %v1954 = vadd.f32 0.0, %v1953
      %v1955 = vpop.f32.mrb[0].mxu0
      %1956 = vmatprep.mubr.bf16.mxu0 0
      %1957 = vmatmul.mubr.bf16.gmra.mrb[0].mxu0 %v1821
      %v1958 = vpop.f32.mrb[0].mxu0
      %v1959 = vadd.f32 0.0, %v1958
      %v1960 = vpop.f32.mrb[0].mxu0
      %v1961 = vpop.f32.mrb[0].mxu0
      %v1962 = vadd.f32 0.0, %v1961
      %v1963 = vpop.f32.mrb[0].mxu0
      %1964 = vmatprep.mubr.bf16.mxu0 0
      %1965 = vmatmul.mubr.bf16.gmra.mrb[0].mxu0 %v1823
      %v1966 = vpop.f32.mrb[0].mxu0
      %v1967 = vadd.f32 0.0, %v1966
      %v1968 = vpop.f32.mrb[0].mxu0
      %v1969 = vpop.f32.mrb[0].mxu0
      %v1970 = vadd.f32 0.0, %v1969
      %v1971 = vpop.f32.mrb[0].mxu0
      %1972 = vmatprep.mubr.bf16.mxu0 0
      %1973 = vmatmul.mubr.bf16.gmra.mrb[0].mxu0 %v1825
      %v1974 = vpop.f32.mrb[0].mxu0
      %v1975 = vadd.f32 0.0, %v1974
      %v1976 = vpop.f32.mrb[0].mxu0
      %v1977 = vpop.f32.mrb[0].mxu0
      %v1978 = vadd.f32 0.0, %v1977
      %v1979 = vpop.f32.mrb[0].mxu0
      %1980 = vmatprep.mubr.bf16.mxu0 0
      %1981 = vmatmul.mubr.bf16.gmra.mrb[0].mxu0 %v1827
      %v1982 = vpop.f32.mrb[0].mxu0
      %v1983 = vadd.f32 0.0, %v1982
      %v1984 = vpop.f32.mrb[0].mxu0
      %v1985 = vpop.f32.mrb[0].mxu0
      %v1986 = vadd.f32 0.0, %v1985
      %v1987 = vpop.f32.mrb[0].mxu0
      %1988 = vmatprep.mubr.bf16.mxu0 0
      %1989 = vmatmul.mubr.bf16.gmra.mrb[0].mxu0 %v1829
      %v1990 = vpop.f32.mrb[0].mxu0
      %v1991 = vadd.f32 0.0, %v1990
      %v1992 = vpop.f32.mrb[0].mxu0
      %v1993 = vpop.f32.mrb[0].mxu0
      %v1994 = vadd.f32 0.0, %v1993
      %v1995 = vpop.f32.mrb[0].mxu0
      %1996 = vmatprep.mubr.bf16.mxu0 0
      %1997 = vmatmul.mubr.bf16.gmra.mrb[0].mxu0 %v1831
      %v1998 = vpop.f32.mrb[0].mxu0
      %v1999 = vadd.f32 0.0, %v1998
      %v2000 = vpop.f32.mrb[0].mxu0
      %v2001 = vpop.f32.mrb[0].mxu0
      %v2002 = vadd.f32 0.0, %v2001
      %v2003 = vpop.f32.mrb[0].mxu0
      %2004 = vmatprep.mubr.bf16.mxu0 0
      %2005 = vmatmul.mubr.bf16.gmra.mrb[0].mxu0 %v783
      %v2006 = vpop.f32.mrb[0].mxu0
      %v2007 = vadd.f32 0.0, %v2006
      %v2008 = vpop.f32.mrb[0].mxu0
      %v2009 = vpop.f32.mrb[0].mxu0
      %v2010 = vadd.f32 0.0, %v2009
      %v2011 = vpop.f32.mrb[0].mxu0
      %2012 = vdwg.mxu0
      %2045 = vrot.lane.b32.xlu0 %v1879, 124
      %v2046 = vpop.permute.xlu0 %2045
      %2047 = vrot.lane.b32.xlu0 %v1882, 124
      %v2048 = vpop.permute.xlu0 %2047
      %2049 = vrot.lane.b32.xlu0 %v1887, 124
      %v2050 = vpop.permute.xlu0 %2049
      %2051 = vrot.lane.b32.xlu0 %v1890, 124
      %v2052 = vpop.permute.xlu0 %2051
      %2053 = vrot.lane.b32.xlu0 %v1895, 124
      %v2054 = vpop.permute.xlu0 %2053
      %2055 = vrot.lane.b32.xlu0 %v1898, 124
      %v2056 = vpop.permute.xlu0 %2055
      %2057 = vrot.lane.b32.xlu0 %v1903, 124
      %v2058 = vpop.permute.xlu0 %2057
      %2059 = vrot.lane.b32.xlu0 %v1906, 124
      %v2060 = vpop.permute.xlu0 %2059
      %2061 = vrot.lane.b32.xlu0 %v1911, 124
      %v2062 = vpop.permute.xlu0 %2061
      %2063 = vrot.lane.b32.xlu0 %v1914, 124
      %v2064 = vpop.permute.xlu0 %2063
      %2065 = vrot.lane.b32.xlu0 %v1919, 124
      %v2066 = vpop.permute.xlu0 %2065
      %2067 = vrot.lane.b32.xlu0 %v1922, 124
      %v2068 = vpop.permute.xlu0 %2067
      %2069 = vrot.lane.b32.xlu0 %v1927, 124
      %v2070 = vpop.permute.xlu0 %2069
      %2071 = vrot.lane.b32.xlu0 %v1930, 124
      %v2072 = vpop.permute.xlu0 %2071
      %2073 = vrot.lane.b32.xlu0 %v1935, 124
      %v2074 = vpop.permute.xlu0 %2073
      %2075 = vrot.lane.b32.xlu0 %v1938, 124
      %v2076 = vpop.permute.xlu0 %2075
      %2077 = vrot.lane.b32.xlu0 %v1943, 124
      %v2078 = vpop.permute.xlu0 %2077
      %2079 = vrot.lane.b32.xlu0 %v1946, 124
      %v2080 = vpop.permute.xlu0 %2079
      %2081 = vrot.lane.b32.xlu0 %v1951, 124
      %v2082 = vpop.permute.xlu0 %2081
      %2083 = vrot.lane.b32.xlu0 %v1954, 124
      %v2084 = vpop.permute.xlu0 %2083
      %2085 = vrot.lane.b32.xlu0 %v1959, 124
      %v2086 = vpop.permute.xlu0 %2085
      %2087 = vrot.lane.b32.xlu0 %v1962, 124
      %v2088 = vpop.permute.xlu0 %2087
      %2089 = vrot.lane.b32.xlu0 %v1967, 124
      %v2090 = vpop.permute.xlu0 %2089
      %2091 = vrot.lane.b32.xlu0 %v1970, 124
      %v2092 = vpop.permute.xlu0 %2091
      %2093 = vrot.lane.b32.xlu0 %v1975, 124
      %v2094 = vpop.permute.xlu0 %2093
      %2095 = vrot.lane.b32.xlu0 %v1978, 124
      %v2096 = vpop.permute.xlu0 %2095
      %2097 = vrot.lane.b32.xlu0 %v1983, 124
      %v2098 = vpop.permute.xlu0 %2097
      %2099 = vrot.lane.b32.xlu0 %v1986, 124
      %v2100 = vpop.permute.xlu0 %2099
      %2101 = vrot.lane.b32.xlu0 %v1991, 124
      %v2102 = vpop.permute.xlu0 %2101
      %2103 = vrot.lane.b32.xlu0 %v1994, 124
      %v2104 = vpop.permute.xlu0 %2103
      %2105 = vrot.lane.b32.xlu0 %v1999, 124
      %v2106 = vpop.permute.xlu0 %2105
      %2107 = vrot.lane.b32.xlu0 %v2002, 124
      %v2108 = vpop.permute.xlu0 %2107
      %v2141 = vadd.f32 %v1871, %v2046
      %v2142 = vadd.f32 %v1874, %v2048
      %v2143 = vadd.f32 %v1879, %v2050
      %v2144 = vadd.f32 %v1882, %v2052
      %v2145 = vadd.f32 %v1887, %v2054
      %v2146 = vadd.f32 %v1890, %v2056
      %v2147 = vadd.f32 %v1895, %v2058
      %v2148 = vadd.f32 %v1898, %v2060
      %v2149 = vadd.f32 %v1903, %v2062
      %v2150 = vadd.f32 %v1906, %v2064
      %v2151 = vadd.f32 %v1911, %v2066
      %v2152 = vadd.f32 %v1914, %v2068
      %v2153 = vadd.f32 %v1919, %v2070
      %v2154 = vadd.f32 %v1922, %v2072
      %v2155 = vadd.f32 %v1927, %v2074
      %v2156 = vadd.f32 %v1930, %v2076
      %v2157 = vadd.f32 %v1935, %v2078
      %v2158 = vadd.f32 %v1938, %v2080
      %v2159 = vadd.f32 %v1943, %v2082
      %v2160 = vadd.f32 %v1946, %v2084
      %v2161 = vadd.f32 %v1951, %v2086
      %v2162 = vadd.f32 %v1954, %v2088
      %v2163 = vadd.f32 %v1959, %v2090
      %v2164 = vadd.f32 %v1962, %v2092
      %v2165 = vadd.f32 %v1967, %v2094
      %v2166 = vadd.f32 %v1970, %v2096
      %v2167 = vadd.f32 %v1975, %v2098
      %v2168 = vadd.f32 %v1978, %v2100
      %v2169 = vadd.f32 %v1983, %v2102
      %v2170 = vadd.f32 %v1986, %v2104
      %v2171 = vadd.f32 %v1991, %v2106
      %v2172 = vadd.f32 %v1994, %v2108
      %2175 = vrot.lane.b32.xlu0 %v1887, 120
      %v2176 = vpop.permute.xlu0 %2175
      %2177 = vrot.lane.b32.xlu0 %v1890, 120
      %v2178 = vpop.permute.xlu0 %2177
      %2179 = vrot.lane.b32.xlu0 %v1895, 120
      %v2180 = vpop.permute.xlu0 %2179
      %2181 = vrot.lane.b32.xlu0 %v1898, 120
      %v2182 = vpop.permute.xlu0 %2181
      %2183 = vrot.lane.b32.xlu0 %v1903, 120
      %v2184 = vpop.permute.xlu0 %2183
      %2185 = vrot.lane.b32.xlu0 %v1906, 120
      %v2186 = vpop.permute.xlu0 %2185
      %2187 = vrot.lane.b32.xlu0 %v1911, 120
      %v2188 = vpop.permute.xlu0 %2187
      %2189 = vrot.lane.b32.xlu0 %v1914, 120
      %v2190 = vpop.permute.xlu0 %2189
      %2191 = vrot.lane.b32.xlu0 %v1919, 120
      %v2192 = vpop.permute.xlu0 %2191
      %2193 = vrot.lane.b32.xlu0 %v1922, 120
      %v2194 = vpop.permute.xlu0 %2193
      %2195 = vrot.lane.b32.xlu0 %v1927, 120
      %v2196 = vpop.permute.xlu0 %2195
      %2197 = vrot.lane.b32.xlu0 %v1930, 120
      %v2198 = vpop.permute.xlu0 %2197
      %2199 = vrot.lane.b32.xlu0 %v1935, 120
      %v2200 = vpop.permute.xlu0 %2199
      %2201 = vrot.lane.b32.xlu0 %v1938, 120
      %v2202 = vpop.permute.xlu0 %2201
      %2203 = vrot.lane.b32.xlu0 %v1943, 120
      %v2204 = vpop.permute.xlu0 %2203
      %2205 = vrot.lane.b32.xlu0 %v1946, 120
      %v2206 = vpop.permute.xlu0 %2205
      %2207 = vrot.lane.b32.xlu0 %v1951, 120
      %v2208 = vpop.permute.xlu0 %2207
      %2209 = vrot.lane.b32.xlu0 %v1954, 120
      %v2210 = vpop.permute.xlu0 %2209
      %2211 = vrot.lane.b32.xlu0 %v1959, 120
      %v2212 = vpop.permute.xlu0 %2211
      %2213 = vrot.lane.b32.xlu0 %v1962, 120
      %v2214 = vpop.permute.xlu0 %2213
      %2215 = vrot.lane.b32.xlu0 %v1967, 120
      %v2216 = vpop.permute.xlu0 %2215
      %2217 = vrot.lane.b32.xlu0 %v1970, 120
      %v2218 = vpop.permute.xlu0 %2217
      %2219 = vrot.lane.b32.xlu0 %v1975, 120
      %v2220 = vpop.permute.xlu0 %2219
      %2221 = vrot.lane.b32.xlu0 %v1978, 120
      %v2222 = vpop.permute.xlu0 %2221
      %2223 = vrot.lane.b32.xlu0 %v1983, 120
      %v2224 = vpop.permute.xlu0 %2223
      %2225 = vrot.lane.b32.xlu0 %v1986, 120
      %v2226 = vpop.permute.xlu0 %2225
      %2227 = vrot.lane.b32.xlu0 %v1991, 120
      %v2228 = vpop.permute.xlu0 %2227
      %2229 = vrot.lane.b32.xlu0 %v1994, 120
      %v2230 = vpop.permute.xlu0 %2229
      %2231 = vrot.lane.b32.xlu0 %v1999, 120
      %v2232 = vpop.permute.xlu0 %2231
      %2233 = vrot.lane.b32.xlu0 %v2002, 120
      %v2234 = vpop.permute.xlu0 %2233
      %2235 = vrot.lane.b32.xlu0 %v2007, 120
      %v2236 = vpop.permute.xlu0 %2235
      %2237 = vrot.lane.b32.xlu0 %v2010, 120
      %v2238 = vpop.permute.xlu0 %2237
      %v2271 = vadd.f32 %v2141, %v2176
      %v2272 = vadd.f32 %v2142, %v2178
      %v2273 = vadd.f32 %v2143, %v2180
      %v2274 = vadd.f32 %v2144, %v2182
      %v2275 = vadd.f32 %v2145, %v2184
      %v2276 = vadd.f32 %v2146, %v2186
      %v2277 = vadd.f32 %v2147, %v2188
      %v2278 = vadd.f32 %v2148, %v2190
      %v2279 = vadd.f32 %v2149, %v2192
      %v2280 = vadd.f32 %v2150, %v2194
      %v2281 = vadd.f32 %v2151, %v2196
      %v2282 = vadd.f32 %v2152, %v2198
      %v2283 = vadd.f32 %v2153, %v2200
      %v2284 = vadd.f32 %v2154, %v2202
      %v2285 = vadd.f32 %v2155, %v2204
      %v2286 = vadd.f32 %v2156, %v2206
      %v2287 = vadd.f32 %v2157, %v2208
      %v2288 = vadd.f32 %v2158, %v2210
      %v2289 = vadd.f32 %v2159, %v2212
      %v2290 = vadd.f32 %v2160, %v2214
      %v2291 = vadd.f32 %v2161, %v2216
      %v2292 = vadd.f32 %v2162, %v2218
      %v2293 = vadd.f32 %v2163, %v2220
      %v2294 = vadd.f32 %v2164, %v2222
      %v2295 = vadd.f32 %v2165, %v2224
      %v2296 = vadd.f32 %v2166, %v2226
      %v2297 = vadd.f32 %v2167, %v2228
      %v2298 = vadd.f32 %v2168, %v2230
      %v2299 = vadd.f32 %v2169, %v2232
      %v2300 = vadd.f32 %v2170, %v2234
      %v2301 = vadd.f32 %v2171, %v2236
      %v2302 = vadd.f32 %v2172, %v2238
      %v2303 = vunpack.c.l.bf16 %v288
      %v2304 = vunpack.c.l.bf16 %v289
      %v2305 = vunpack.c.l.bf16 %v290
      %v2306 = vunpack.c.l.bf16 %v291
      %v2307 = vunpack.c.l.bf16 %v292
      %v2308 = vunpack.c.l.bf16 %v293
      %v2309 = vunpack.c.l.bf16 %v294
      %v2310 = vunpack.c.l.bf16 %v295
      %v2311 = vunpack.c.l.bf16 %v296
      %v2312 = vunpack.c.l.bf16 %v297
      %v2313 = vunpack.c.l.bf16 %v298
      %v2314 = vunpack.c.l.bf16 %v299
      %v2315 = vunpack.c.l.bf16 %v300
      %v2316 = vunpack.c.l.bf16 %v301
      %v2317 = vunpack.c.l.bf16 %v302
      %v2318 = vunpack.c.l.bf16 %v303
      %v2319 = vunpack.c.l.bf16 %v304
      %v2320 = vunpack.c.l.bf16 %v305
      %v2321 = vunpack.c.l.bf16 %v306
      %v2322 = vunpack.c.l.bf16 %v307
      %v2323 = vunpack.c.l.bf16 %v308
      %v2324 = vunpack.c.l.bf16 %v309
      %v2325 = vunpack.c.l.bf16 %v310
      %v2326 = vunpack.c.l.bf16 %v311
      %v2327 = vunpack.c.l.bf16 %v312
      %v2328 = vunpack.c.l.bf16 %v313
      %v2329 = vunpack.c.l.bf16 %v314
      %v2330 = vunpack.c.l.bf16 %v315
      %v2331 = vunpack.c.l.bf16 %v316
      %v2332 = vunpack.c.l.bf16 %v317
      %v2333 = vunpack.c.l.bf16 %v318
      %v2334 = vunpack.c.l.bf16 %v319
      %v2336 = vlaneseq
      %v2337 = vshrl.u32 %v2336, 7
      %v2338 = vsub.s32 0, %v2337
      %v2339 = vrot.slane %v286, %v2338
      %v2341 = vmul.f32 %v2271, %v2339
      %v2342 = vmul.f32 %v2272, %v2339
      %v2343 = vmul.f32 %v2273, %v2339
      %v2344 = vmul.f32 %v2274, %v2339
      %v2345 = vmul.f32 %v2275, %v2339
      %v2346 = vmul.f32 %v2276, %v2339
      %v2347 = vmul.f32 %v2277, %v2339
      %v2348 = vmul.f32 %v2278, %v2339
      %v2349 = vmul.f32 %v2279, %v2339
      %v2350 = vmul.f32 %v2280, %v2339
      %v2351 = vmul.f32 %v2281, %v2339
      %v2352 = vmul.f32 %v2282, %v2339
      %v2353 = vmul.f32 %v2283, %v2339
      %v2354 = vmul.f32 %v2284, %v2339
      %v2355 = vmul.f32 %v2285, %v2339
      %v2356 = vmul.f32 %v2286, %v2339
      %v2357 = vmul.f32 %v2287, %v2339
      %v2358 = vmul.f32 %v2288, %v2339
      %v2359 = vmul.f32 %v2289, %v2339
      %v2360 = vmul.f32 %v2290, %v2339
      %v2361 = vmul.f32 %v2291, %v2339
      %v2362 = vmul.f32 %v2292, %v2339
      %v2363 = vmul.f32 %v2293, %v2339
      %v2364 = vmul.f32 %v2294, %v2339
      %v2365 = vmul.f32 %v2295, %v2339
      %v2366 = vmul.f32 %v2296, %v2339
      %v2367 = vmul.f32 %v2297, %v2339
      %v2368 = vmul.f32 %v2298, %v2339
      %v2369 = vmul.f32 %v2299, %v2339
      %v2370 = vmul.f32 %v2300, %v2339
      %v2371 = vmul.f32 %v2301, %v2339
      %v2372 = vmul.f32 %v2302, %v2339
      %v2374 = vlaneseq
      %v2375 = vshrl.u32 %v2374, 7
      %v2376 = vsub.s32 0, %v2375
      %v2377 = vrot.slane %v287, %v2376
      %v2379 = vadd.f32 %v2341, %v2377
      %v2380 = vadd.f32 %v2342, %v2377
      %v2381 = vadd.f32 %v2343, %v2377
      %v2382 = vadd.f32 %v2344, %v2377
      %v2383 = vadd.f32 %v2345, %v2377
      %v2384 = vadd.f32 %v2346, %v2377
      %v2385 = vadd.f32 %v2347, %v2377
      %v2386 = vadd.f32 %v2348, %v2377
      %v2387 = vadd.f32 %v2349, %v2377
      %v2388 = vadd.f32 %v2350, %v2377
      %v2389 = vadd.f32 %v2351, %v2377
      %v2390 = vadd.f32 %v2352, %v2377
      %v2391 = vadd.f32 %v2353, %v2377
      %v2392 = vadd.f32 %v2354, %v2377
      %v2393 = vadd.f32 %v2355, %v2377
      %v2394 = vadd.f32 %v2356, %v2377
      %v2395 = vadd.f32 %v2357, %v2377
      %v2396 = vadd.f32 %v2358, %v2377
      %v2397 = vadd.f32 %v2359, %v2377
      %v2398 = vadd.f32 %v2360, %v2377
      %v2399 = vadd.f32 %v2361, %v2377
      %v2400 = vadd.f32 %v2362, %v2377
      %v2401 = vadd.f32 %v2363, %v2377
      %v2402 = vadd.f32 %v2364, %v2377
      %v2403 = vadd.f32 %v2365, %v2377
      %v2404 = vadd.f32 %v2366, %v2377
      %v2405 = vadd.f32 %v2367, %v2377
      %v2406 = vadd.f32 %v2368, %v2377
      %v2407 = vadd.f32 %v2369, %v2377
      %v2408 = vadd.f32 %v2370, %v2377
      %v2409 = vadd.f32 %v2371, %v2377
      %v2410 = vadd.f32 %v2372, %v2377
      %v2411 = vadd.f32 %v2379, %v2303
      %v2412 = vadd.f32 %v2380, %v2304
      %v2413 = vadd.f32 %v2381, %v2305
      %v2414 = vadd.f32 %v2382, %v2306
      %v2415 = vadd.f32 %v2383, %v2307
      %v2416 = vadd.f32 %v2384, %v2308
      %v2417 = vadd.f32 %v2385, %v2309
      %v2418 = vadd.f32 %v2386, %v2310
      %v2419 = vadd.f32 %v2387, %v2311
      %v2420 = vadd.f32 %v2388, %v2312
      %v2421 = vadd.f32 %v2389, %v2313
      %v2422 = vadd.f32 %v2390, %v2314
      %v2423 = vadd.f32 %v2391, %v2315
      %v2424 = vadd.f32 %v2392, %v2316
      %v2425 = vadd.f32 %v2393, %v2317
      %v2426 = vadd.f32 %v2394, %v2318
      %v2427 = vadd.f32 %v2395, %v2319
      %v2428 = vadd.f32 %v2396, %v2320
      %v2429 = vadd.f32 %v2397, %v2321
      %v2430 = vadd.f32 %v2398, %v2322
      %v2431 = vadd.f32 %v2399, %v2323
      %v2432 = vadd.f32 %v2400, %v2324
      %v2433 = vadd.f32 %v2401, %v2325
      %v2434 = vadd.f32 %v2402, %v2326
      %v2435 = vadd.f32 %v2403, %v2327
      %v2436 = vadd.f32 %v2404, %v2328
      %v2437 = vadd.f32 %v2405, %v2329
      %v2438 = vadd.f32 %v2406, %v2330
      %v2439 = vadd.f32 %v2407, %v2331
      %v2440 = vadd.f32 %v2408, %v2332
      %v2441 = vadd.f32 %v2409, %v2333
      %v2442 = vadd.f32 %v2410, %v2334
      %v2443 = vmax.f32 %v2411, 0.0
      %v2444 = vmax.f32 %v2412, 0.0
      %v2445 = vmax.f32 %v2413, 0.0
      %v2446 = vmax.f32 %v2414, 0.0
      %v2447 = vmax.f32 %v2415, 0.0
      %v2448 = vmax.f32 %v2416, 0.0
      %v2449 = vmax.f32 %v2417, 0.0
      %v2450 = vmax.f32 %v2418, 0.0
      %v2451 = vmax.f32 %v2419, 0.0
      %v2452 = vmax.f32 %v2420, 0.0
      %v2453 = vmax.f32 %v2421, 0.0
      %v2454 = vmax.f32 %v2422, 0.0
      %v2455 = vmax.f32 %v2423, 0.0
      %v2456 = vmax.f32 %v2424, 0.0
      %v2457 = vmax.f32 %v2425, 0.0
      %v2458 = vmax.f32 %v2426, 0.0
      %v2459 = vmax.f32 %v2427, 0.0
      %v2460 = vmax.f32 %v2428, 0.0
      %v2461 = vmax.f32 %v2429, 0.0
      %v2462 = vmax.f32 %v2430, 0.0
      %v2463 = vmax.f32 %v2431, 0.0
      %v2464 = vmax.f32 %v2432, 0.0
      %v2465 = vmax.f32 %v2433, 0.0
      %v2466 = vmax.f32 %v2434, 0.0
      %v2467 = vmax.f32 %v2435, 0.0
      %v2468 = vmax.f32 %v2436, 0.0
      %v2469 = vmax.f32 %v2437, 0.0
      %v2470 = vmax.f32 %v2438, 0.0
      %v2471 = vmax.f32 %v2439, 0.0
      %v2472 = vmax.f32 %v2440, 0.0
      %v2473 = vmax.f32 %v2441, 0.0
      %v2474 = vmax.f32 %v2442, 0.0
      %v2475 = vpack.c.bf16 %v2444, %v2443
      %v2476 = vpack.c.bf16 %v2446, %v2445
      %v2477 = vpack.c.bf16 %v2448, %v2447
      %v2478 = vpack.c.bf16 %v2450, %v2449
      %v2479 = vpack.c.bf16 %v2452, %v2451
      %v2480 = vpack.c.bf16 %v2454, %v2453
      %v2481 = vpack.c.bf16 %v2456, %v2455
      %v2482 = vpack.c.bf16 %v2458, %v2457
      %v2483 = vpack.c.bf16 %v2460, %v2459
      %v2484 = vpack.c.bf16 %v2462, %v2461
      %v2485 = vpack.c.bf16 %v2464, %v2463
      %v2486 = vpack.c.bf16 %v2466, %v2465
      %v2487 = vpack.c.bf16 %v2468, %v2467
      %v2488 = vpack.c.bf16 %v2470, %v2469
      %v2489 = vpack.c.bf16 %v2472, %v2471
      %v2490 = vpack.c.bf16 %v2474, %v2473
      %v2507 = vunpack.c.l.b16 %v2475
      %v2508 = vunpack.c.h.b16 %v2475
      %v2509 = vunpack.c.l.b16 %v2476
      %v2510 = vunpack.c.h.b16 %v2476
      %v2511 = vunpack.c.l.b16 %v2477
      %v2512 = vunpack.c.h.b16 %v2477
      %v2513 = vunpack.c.l.b16 %v2478
      %v2514 = vunpack.c.h.b16 %v2478
      %v2515 = vunpack.c.l.b16 %v2479
      %v2516 = vunpack.c.h.b16 %v2479
      %v2517 = vunpack.c.l.b16 %v2480
      %v2518 = vunpack.c.h.b16 %v2480
      %v2519 = vunpack.c.l.b16 %v2481
      %v2520 = vunpack.c.h.b16 %v2481
      %v2521 = vunpack.c.l.b16 %v2482
      %v2522 = vunpack.c.h.b16 %v2482
      %v2523 = vunpack.c.l.b16 %v2483
      %v2524 = vunpack.c.h.b16 %v2483
      %v2525 = vunpack.c.l.b16 %v2484
      %v2526 = vunpack.c.h.b16 %v2484
      %v2527 = vunpack.c.l.b16 %v2485
      %v2528 = vunpack.c.h.b16 %v2485
      %v2529 = vunpack.c.l.b16 %v2486
      %v2530 = vunpack.c.h.b16 %v2486
      %v2531 = vunpack.c.l.b16 %v2487
      %v2532 = vunpack.c.h.b16 %v2487
      %v2533 = vunpack.c.l.b16 %v2488
      %v2534 = vunpack.c.h.b16 %v2488
      %v2535 = vunpack.c.l.b16 %v2489
      %v2536 = vunpack.c.h.b16 %v2489
      %v2537 = vunpack.c.l.b16 %v2490
      %v2538 = vunpack.c.h.b16 %v2490
      %v2539 = vpack.c.b16 %v2507, %v2507
      %v2540 = vpack.c.b16 %v2508, %v2508
      %v2541 = vpack.c.b16 %v2509, %v2509
      %v2542 = vpack.c.b16 %v2510, %v2510
      %v2543 = vpack.c.b16 %v2511, %v2511
      %v2544 = vpack.c.b16 %v2512, %v2512
      %v2545 = vpack.c.b16 %v2513, %v2513
      %v2546 = vpack.c.b16 %v2514, %v2514
      %v2547 = vpack.c.b16 %v2515, %v2515
      %v2548 = vpack.c.b16 %v2516, %v2516
      %v2549 = vpack.c.b16 %v2517, %v2517
      %v2550 = vpack.c.b16 %v2518, %v2518
      %v2551 = vpack.c.b16 %v2519, %v2519
      %v2552 = vpack.c.b16 %v2520, %v2520
      %v2553 = vpack.c.b16 %v2521, %v2521
      %v2554 = vpack.c.b16 %v2522, %v2522
      %v2555 = vpack.c.b16 %v2523, %v2523
      %v2556 = vpack.c.b16 %v2524, %v2524
      %v2557 = vpack.c.b16 %v2525, %v2525
      %v2558 = vpack.c.b16 %v2526, %v2526
      %v2559 = vpack.c.b16 %v2527, %v2527
      %v2560 = vpack.c.b16 %v2528, %v2528
      %v2561 = vpack.c.b16 %v2529, %v2529
      %v2562 = vpack.c.b16 %v2530, %v2530
      %v2563 = vpack.c.b16 %v2531, %v2531
      %v2564 = vpack.c.b16 %v2532, %v2532
      %v2565 = vpack.c.b16 %v2533, %v2533
      %v2566 = vpack.c.b16 %v2534, %v2534
      %v2567 = vpack.c.b16 %v2535, %v2535
      %v2568 = vpack.c.b16 %v2536, %v2536
      %v2569 = vpack.c.b16 %v2537, %v2537
      %v2570 = vpack.c.b16 %v2538, %v2538
      %vm2603 = vcmask 27648
      %2604 = vst.msk [vmem:[%s278] sm:$0xf] %vm2603, %v2539
      %2605 = vst.msk [vmem:[%s278 + $0x4] sm:$0xf] %vm2603, %v2540
      %2606 = vst.msk [vmem:[%s278 + $0x8] sm:$0xf] %vm2603, %v2541
      %2607 = vst.msk [vmem:[%s278 + $0xc] sm:$0xf] %vm2603, %v2542
      %2608 = vst.msk [vmem:[%s278 + $0x10] sm:$0xf] %vm2603, %v2543
      %2609 = vst.msk [vmem:[%s278 + $0x14] sm:$0xf] %vm2603, %v2544
      %2610 = vst.msk [vmem:[%s278 + $0x18] sm:$0xf] %vm2603, %v2545
      %2611 = vst.msk [vmem:[%s278 + $0x1c] sm:$0xf] %vm2603, %v2546
      %2612 = vst.msk [vmem:[%s278 + $0x20] sm:$0xf] %vm2603, %v2547
      %2613 = vst.msk [vmem:[%s278 + $0x24] sm:$0xf] %vm2603, %v2548
      %2614 = vst.msk [vmem:[%s278 + $0x28] sm:$0xf] %vm2603, %v2549
      %2615 = vst.msk [vmem:[%s278 + $0x2c] sm:$0xf] %vm2603, %v2550
      %2616 = vst.msk [vmem:[%s278 + $0x30] sm:$0xf] %vm2603, %v2551
      %2617 = vst.msk [vmem:[%s278 + $0x34] sm:$0xf] %vm2603, %v2552
      %2618 = vst.msk [vmem:[%s278 + $0x38] sm:$0xf] %vm2603, %v2553
      %2619 = vst.msk [vmem:[%s278 + $0x3c] sm:$0xf] %vm2603, %v2554
      %2620 = vst.msk [vmem:[%s278 + $0x40] sm:$0xf] %vm2603, %v2555
      %2621 = vst.msk [vmem:[%s278 + $0x44] sm:$0xf] %vm2603, %v2556
      %2622 = vst.msk [vmem:[%s278 + $0x48] sm:$0xf] %vm2603, %v2557
      %2623 = vst.msk [vmem:[%s278 + $0x4c] sm:$0xf] %vm2603, %v2558
      %2624 = vst.msk [vmem:[%s278 + $0x50] sm:$0xf] %vm2603, %v2559
      %2625 = vst.msk [vmem:[%s278 + $0x54] sm:$0xf] %vm2603, %v2560
      %2626 = vst.msk [vmem:[%s278 + $0x58] sm:$0xf] %vm2603, %v2561
      %2627 = vst.msk [vmem:[%s278 + $0x5c] sm:$0xf] %vm2603, %v2562
      %2628 = vst.msk [vmem:[%s278 + $0x60] sm:$0xf] %vm2603, %v2563
      %2629 = vst.msk [vmem:[%s278 + $0x64] sm:$0xf] %vm2603, %v2564
      %2630 = vst.msk [vmem:[%s278 + $0x68] sm:$0xf] %vm2603, %v2565
      %2631 = vst.msk [vmem:[%s278 + $0x6c] sm:$0xf] %vm2603, %v2566
      %2632 = vst.msk [vmem:[%s278 + $0x70] sm:$0xf] %vm2603, %v2567
      %2633 = vst.msk [vmem:[%s278 + $0x74] sm:$0xf] %vm2603, %v2568
      %2634 = vst.msk [vmem:[%s278 + $0x78] sm:$0xf] %vm2603, %v2569
      %2635 = vst.msk [vmem:[%s278 + $0x7c] sm:$0xf] %vm2603, %v2570
      %p2636 = scmp.lt.s32.totalorder %s18, 1
      %s2637 = scalar_select %p2636, %s18, 1
      %s2638 = smul.addr %s2637, 32
      %s2639 = smul.addr %s2638, 4
      %s2640 = scalar_lea.vmem %s7, %s2639
      // Predicated region
      $region49: #{basic_block_forward.1} parent=47 // pred_check
        %p2641 = pneg %p188
      $region50: #{basic_block_forward.1} parent=47 // pred_check_branch
        %2643 = sbr.rel (%p2641) target = $region52
      $region51: #{basic_block_forward.1} parent=47 // pred_region
        _
      $region52: #{basic_block_forward.1} parent=47 // pred_fallthru
        _
    $region48: #{basic_block_forward.1} parent=5 // pred_fallthru
      _
    %p2644 = scmp.le.s32.totalorder 2, %s13
    // Predicated region
    $region53: #{basic_block_forward.1} parent=5 // pred_check
      %p2645 = pneg %p2644
    $region54: #{basic_block_forward.1} parent=5 // pred_check_branch
      %2647 = sbr.rel (%p2645) target = $region56
    $region55: #{basic_block_forward.1} parent=5 // pred_region
      %s2648 = ssub.s32 %s13, 2
      // Predicated region
      $region57: #{basic_block_forward.1} parent=55 // pred_check
        %p2649 = pneg %p194
      $region58: #{basic_block_forward.1} parent=55 // pred_check_branch
        %2651 = sbr.rel (%p2649) target = $region60
      $region59: #{basic_block_forward.1} parent=55 // pred_region
        %p2652 = scmp.lt.s32.totalorder %s19, 1
        %s2653 = scalar_select %p2652, %s19, 1
        %s2654 = smul.addr %s2653, 32
        %s2655 = smul.addr %s2654, 4
        %s2656 = scalar_lea.vmem %s7, %s2655
      $region60: #{basic_block_forward.1} parent=55 // pred_fallthru
        _
    $region56: #{basic_block_forward.1} parent=5 // pred_fallthru
      _
  $region6: #{basic_block_forward.1} parent=0 // loop_footer
    %s17 = sadd.s32 1, %s13
  $region7: #{basic_block_forward.1} parent=0 // loop_footer_branch
    %12 = sbr.rel target = $region3
  $region8: #{basic_block_forward.1} parent=0 // loop_exit
    _

</llo_original>
